<compile_context>
chip_gen: v6e
topology: v6e:2x2x1
jax: 0.10.0
libtpu: 0.0.40
codegen_flags: <defaults>
</compile_context>

<pallas_src>
import functools

import jax
import jax.numpy as jnp
from jax.experimental import pallas as pl
from jax.experimental.pallas import tpu as pltpu

LANE = 128
SUBLANE = 8
_MIB = 1024 * 1024


def _round_up(v, m):
    return (v + m - 1) // m * m


def _cdiv(a, b):
    return (a + b - 1) // b


def _vmem_capacity_bytes():
    try:
        info = pltpu.get_tpu_info()
        return int(getattr(info, "vmem_capacity_bytes"))
    except Exception:
        return 64 * _MIB  # conservative default (v7x per-TensorCore VMEM)


# ----------------------------------------------------------------------------
# PATH A: fused kernel (resident A, manual strip DMA, tiled epilogue)
# ----------------------------------------------------------------------------
def _cwgcn_fused_kernel(n_tiles, tm,
                        a_hbm, xw1_ref, b1_ref, w2_ref, b2_ref, w3_ref, b3_ref,
                        h1_ref, h2_ref, logits_ref,
                        a_res, hw2_res, hw3_res, dma_sem):
    j = pl.program_id(0)

    def fetch(idx, slot):
        # DMA a (tm, npad) row strip of A_hat straight into the resident scratch.
        pltpu.make_async_copy(a_hbm.at[idx], a_res.at[idx], dma_sem.at[slot]).start()

    @pl.when(j == 0)
    def _():
        fetch(0, 0)

    @pl.when(j + 1 < n_tiles)
    def _():
        fetch(j + 1, (j + 1) % 2)          # prefetch next strip (other sem slot)

    # Wait for this step's strip to land.
    pltpu.make_async_copy(a_hbm.at[j], a_res.at[j], dma_sem.at[j % 2]).wait()

    row0 = pl.multiple_of(j * tm, tm)
    a_strip = a_res[j]                                     # (tm, npad) bf16

    # ---- layer 1: h1 = relu(A @ (X W1) + b1) ; dropout(eval) = identity -----
    z1 = jnp.dot(a_strip, xw1_ref[...], preferred_element_type=jnp.float32)
    h1 = jnp.maximum(z1 + b1_ref[...], 0.0)                # f32 bias + ReLU
    h1_ref[...] = h1                                       # streamed back per strip

    # Stash bf16(h1) @ W2 for the layer-2 epilogue (no f32 readback later).
    hw2 = jnp.dot(h1.astype(jnp.bfloat16), w2_ref[...],
                  preferred_element_type=jnp.float32)
    hw2_res[pl.ds(row0, tm), :] = hw2.astype(jnp.bfloat16)

    # ---- layers 2 & 3: tiled epilogue once A / h1W2 are fully resident -------
    @pl.when(j == n_tiles - 1)
    def _():
        # conv2: h2 = A @ (h1 W2) + b2  (last bottleneck layer: no activation)
        @pl.loop(0, n_tiles)
        def _(r):
            r0 = pl.multiple_of(r * tm, tm)
            z2 = jnp.dot(a_res[r], hw2_res[...],
                         preferred_element_type=jnp.float32)
            h2 = z2 + b2_ref[...]
            h2_ref[pl.ds(r0, tm), :] = h2
            hw3 = jnp.dot(h2.astype(jnp.bfloat16), w3_ref[...],
                          preferred_element_type=jnp.float32)
            hw3_res[pl.ds(r0, tm), :] = hw3.astype(jnp.bfloat16)

        # classifier: logits = A @ (h2 W3) + b3
        @pl.loop(0, n_tiles)
        def _(r):
            r0 = pl.multiple_of(r * tm, tm)
            z3 = jnp.dot(a_res[r], hw3_res[...],
                         preferred_element_type=jnp.float32)
            logits_ref[pl.ds(r0, tm), :] = z3 + b3_ref[...]


def _forward_fused(a_p, xw1, b1, w2, b2, w3, b3, *, tm, n_tiles, vmem_limit):
    npad = a_p.shape[0]
    hidp = xw1.shape[1]
    ncp = w3.shape[1]
    a_strips = a_p.reshape(n_tiles, tm, npad)              # free (contiguous)

    flops = 2 * npad * npad * (2 * hidp + ncp) + 2 * npad * (hidp * hidp + hidp * ncp)
    bytes_accessed = (npad * npad * 2 + npad * hidp * 2
                      + (hidp * hidp + hidp * ncp) * 2
                      + npad * (2 * hidp + ncp) * 4)

    grid_spec = pltpu.PrefetchScalarGridSpec(
        num_scalar_prefetch=0,
        grid=(n_tiles,),
        in_specs=[
            pl.BlockSpec(memory_space=pl.ANY),              # A_hat (manual strip DMA)
            pl.BlockSpec((npad, hidp), lambda j: (0, 0)),   # X @ W1 (resident)
            pl.BlockSpec((1, hidp), lambda j: (0, 0)),      # b1
            pl.BlockSpec((hidp, hidp), lambda j: (0, 0)),   # W2
            pl.BlockSpec((1, hidp), lambda j: (0, 0)),      # b2
            pl.BlockSpec((hidp, ncp), lambda j: (0, 0)),    # W3
            pl.BlockSpec((1, ncp), lambda j: (0, 0)),       # b3
        ],
        out_specs=[
            pl.BlockSpec((tm, hidp), lambda j: (j, 0)),     # h1 (streamed per strip)
            pl.BlockSpec((npad, hidp), lambda j: (0, 0)),   # h2 (written in epilogue)
            pl.BlockSpec((npad, ncp), lambda j: (0, 0)),    # logits (epilogue)
        ],
        scratch_shapes=[
            pltpu.VMEM((n_tiles, tm, npad), jnp.bfloat16),  # resident A_hat
            pltpu.VMEM((npad, hidp), jnp.bfloat16),         # bf16(h1) @ W2
            pltpu.VMEM((npad, ncp), jnp.bfloat16),          # bf16(h2) @ W3
            pltpu.SemaphoreType.DMA((2,)),                  # strip prefetch sems
        ],
    )

    return pl.pallas_call(
        functools.partial(_cwgcn_fused_kernel, n_tiles, tm),
        out_shape=(
            jax.ShapeDtypeStruct((npad, hidp), jnp.float32),
            jax.ShapeDtypeStruct((npad, hidp), jnp.float32),
            jax.ShapeDtypeStruct((npad, ncp), jnp.float32),
        ),
        grid_spec=grid_spec,
        compiler_params=pltpu.CompilerParams(
            # The row axis carries the resident A / hw2 / hw3 scratch -> sequential.
            dimension_semantics=("arbitrary",),
            vmem_limit_bytes=vmem_limit,
        ),
        cost_estimate=pl.CostEstimate(flops=int(flops), transcendentals=0,
                                      bytes_accessed=int(bytes_accessed)),
    )(a_strips, xw1, b1, w2, b2, w3, b3)


# ----------------------------------------------------------------------------
# PATH B: streaming fallback (re-streams A per layer, rows "parallel")
# ----------------------------------------------------------------------------
def _aggregate_kernel(apply_relu, a_ref, y_ref, b_ref, o_ref):
    z = jnp.dot(a_ref[...], y_ref[...], preferred_element_type=jnp.float32)
    z = z + b_ref[...]
    if apply_relu:
        z = jnp.maximum(z, 0.0)
    o_ref[...] = z


def _aggregate(a_p, y, b, *, apply_relu, tm, vmem_limit):
    npad = a_p.shape[0]
    d = y.shape[1]
    n_tiles = npad // tm
    return pl.pallas_call(
        functools.partial(_aggregate_kernel, apply_relu),
        out_shape=jax.ShapeDtypeStruct((npad, d), jnp.float32),
        grid_spec=pltpu.PrefetchScalarGridSpec(
            num_scalar_prefetch=0,
            grid=(n_tiles,),
            in_specs=[
                pl.BlockSpec((tm, npad), lambda j: (j, 0)),  # A_hat row strip (pipelined)
                pl.BlockSpec((npad, d), lambda j: (0, 0)),   # Y = H @ W (resident)
                pl.BlockSpec((1, d), lambda j: (0, 0)),      # bias
            ],
            out_specs=pl.BlockSpec((tm, d), lambda j: (j, 0)),
        ),
        compiler_params=pltpu.CompilerParams(
            dimension_semantics=("parallel",),               # megacore-shardable
            vmem_limit_bytes=vmem_limit,
        ),
    )(a_p, y, b)


def _forward_streaming(a_p, xw1, b1, w2, b2, w3, b3, *, tm, vmem_limit):
    h1 = _aggregate(a_p, xw1, b1, apply_relu=True, tm=tm, vmem_limit=vmem_limit)
    y2 = jnp.dot(h1.astype(jnp.bfloat16), w2,
                 preferred_element_type=jnp.float32).astype(jnp.bfloat16)
    h2 = _aggregate(a_p, y2, b2, apply_relu=False, tm=tm, vmem_limit=vmem_limit)
    y3 = jnp.dot(h2.astype(jnp.bfloat16), w3,
                 preferred_element_type=jnp.float32).astype(jnp.bfloat16)
    logits = _aggregate(a_p, y3, b3, apply_relu=False, tm=tm, vmem_limit=vmem_limit)
    return h1, h2, logits


# ----------------------------------------------------------------------------
# Public wrapper: padding, path selection, slicing
# ----------------------------------------------------------------------------
def cwgcn_forward(params, x, a_hat, *, tile_rows=512, force_streaming=False):
    n, fin = x.shape
    hid = params["hid_dim"]
    ncls = params["num_classes"]
    hidp = params["conv1_w"].shape[1]                       # lane-padded hid
    ncp = params["cls_w"].shape[1]                          # lane-padded classes

    # Lane-aligned node padding; tm divides npad exactly.
    npad0 = _round_up(max(n, LANE), LANE)
    n_tiles = _cdiv(npad0, tile_rows)
    tm = _round_up(_cdiv(npad0, n_tiles), LANE)
    npad = tm * n_tiles

    # Pad with isolated dummy nodes (zero A rows/cols, zero features); bf16
    # halves the HBM footprint of the dominant N^2 array.
    a_p = jnp.zeros((npad, npad), jnp.bfloat16).at[:n, :n].set(
        a_hat.astype(jnp.bfloat16))
    x_p = jnp.zeros((npad, fin), jnp.bfloat16).at[:n, :].set(
        x.astype(jnp.bfloat16))

    # Hoisted layer-1 feature transform (per review: same N^2 MXU time, fewer
    # in-kernel dots/casts and two fewer pipelined kernel inputs).
    xw1 = jnp.dot(x_p, params["conv1_w"],
                  preferred_element_type=jnp.float32).astype(jnp.bfloat16)

    cap = _vmem_capacity_bytes()
    budget = cap - 4 * _MIB                                 # Mosaic internal-scratch headroom

    need_fused = int(1.15 * (
        npad * npad * 2                                     # resident A_hat scratch
        + npad * (hidp + ncp) * 2                           # hw2 / hw3 scratches
        + 2 * npad * hidp * 2                               # xw1 (double-buffered)
        + 2 * (hidp * hidp + hidp * ncp) * 2                # W2 / W3 (double-buffered)
        + 2 * tm * hidp * 4                                 # h1 out (double-buffered)
        + npad * (hidp + ncp) * 4                           # h2 / logits resident outs
        + 2 * _MIB))                                        # bias blocks + slack

    if (not force_streaming) and need_fused <= budget:
        vmem_limit = int(min(budget, max(need_fused, 32 * _MIB)))
        h1_p, h2_p, logits_p = _forward_fused(
            a_p, xw1, params["conv1_b"], params["conv2_w"], params["conv2_b"],
            params["cls_w"], params["cls_b"],
            tm=tm, n_tiles=n_tiles, vmem_limit=vmem_limit)
    else:
        # Resident-A footprint does not fit (or streaming forced): re-stream
        # A_hat per layer with a parallel row axis instead.
        tm_b = tm
        while 2 * tm_b * npad * 2 > 8 * _MIB and tm_b > LANE:
            tm_b //= 2                                      # shrink the strip double-buffer
        need_stream = int(2 * tm_b * npad * 2
                          + 4 * npad * max(hidp, ncp) * 4 + 4 * _MIB)
        vmem_limit = int(min(budget, max(need_stream, 32 * _MIB)))
        h1_p, h2_p, logits_p = _forward_streaming(
            a_p, xw1, params["conv1_b"], params["conv2_w"], params["conv2_b"],
            params["cls_w"], params["cls_b"], tm=tm_b, vmem_limit=vmem_limit)

    logits = logits_p[:n, :ncls]
    return logits, [h1_p[:n, :hid], h2_p[:n, :hid]]


# ----------------------------------------------------------------------------
# Glue: GCN normalization (dense) and deterministic parameter init
# ----------------------------------------------------------------------------
def build_normalized_adjacency(edge_index, num_nodes, edge_weight=None):
    """Dense D^{-1/2} (A + I) D^{-1/2}, matching PyG GCNConv defaults."""
    src = edge_index[0]
    dst = edge_index[1]
    if edge_weight is None:
        edge_weight = jnp.ones((src.shape[0],), dtype=jnp.float32)
    a = jnp.zeros((num_nodes, num_nodes), dtype=jnp.float32)
    a = a.at[dst, src].add(edge_weight)                     # row = target node
    a = a + jnp.eye(num_nodes, dtype=jnp.float32)           # self loops
    deg = jnp.sum(a, axis=1)
    dinv = jnp.where(deg > 0, 1.0 / jnp.sqrt(deg), 0.0)
    return (dinv[:, None] * a) * dinv[None, :]


def glorot(key, fan_in, fan_out):
    limit = jnp.sqrt(6.0 / (fan_in + fan_out))
    return jax.random.uniform(
        key, (fan_in, fan_out), dtype=jnp.float32, minval=-limit, maxval=limit)


def _pad_weight(w, rows, cols, dtype):
    out = jnp.zeros((rows, cols), jnp.float32)
    out = out.at[:w.shape[0], :w.shape[1]].set(w)
    return out.astype(dtype)


def init_params(key, in_dim, hid_dim, num_classes):
    """Weights lane-padded (zero cols/rows) to 128, stored bf16 for the MXU;
    biases stay f32 (bias add happens on the f32 accumulator)."""
    hidp = _round_up(hid_dim, LANE)
    ncp = _round_up(num_classes, LANE)
    k1, k2, k3 = jax.random.split(key, 3)
    return {
        "conv1_w": _pad_weight(glorot(k1, in_dim, hid_dim), in_dim, hidp, jnp.bfloat16),
        "conv1_b": jnp.zeros((1, hidp), jnp.float32),
        "conv2_w": _pad_weight(glorot(k2, hid_dim, hid_dim), hidp, hidp, jnp.bfloat16),
        "conv2_b": jnp.zeros((1, hidp), jnp.float32),
        "cls_w": _pad_weight(glorot(k3, hid_dim, num_classes), hidp, ncp, jnp.bfloat16),
        "cls_b": jnp.zeros((1, ncp), jnp.float32),
        "hid_dim": hid_dim,
        "num_classes": num_classes,
    }


if __name__ == "__main__":
    key = jax.random.PRNGKey(0)
    kx, kp = jax.random.split(key)

    num_nodes = 64
    in_dim = 16
    hid_dim = 32
    num_classes = 8

    x = jax.random.normal(kx, (num_nodes, in_dim), dtype=jnp.float32)

    # Deterministic graph: bidirectional ring.
    idx = jnp.arange(num_nodes, dtype=jnp.int32)
    nxt = (idx + 1) % num_nodes
    edge_index = jnp.stack([jnp.concatenate([idx, nxt]),
                            jnp.concatenate([nxt, idx])], axis=0)

    a_hat = build_normalized_adjacency(edge_index, num_nodes)
    params = init_params(kp, in_dim, hid_dim, num_classes)

    # PATH A (fused, resident A) and PATH B (streaming fallback) — run both and
    # cross-check so the fallback is also exercised.
    logits, x_list = cwgcn_forward(params, x, a_hat)
    logits_s, x_list_s = cwgcn_forward(params, x, a_hat, force_streaming=True)
    jax.block_until_ready((logits, x_list, logits_s, x_list_s))

    assert logits.shape == (num_nodes, num_classes)
    assert x_list[0].shape == (num_nodes, hid_dim)
    assert x_list[1].shape == (num_nodes, hid_dim)
    assert bool(jnp.all(jnp.isfinite(logits)))
    assert bool(jnp.all(jnp.isfinite(logits_s)))
    # Both paths compute the same bf16/f32 math -> should agree tightly.
    assert float(jnp.max(jnp.abs(logits - logits_s))) < 5e-2
    assert float(jnp.max(jnp.abs(x_list[0] - x_list_s[0]))) < 5e-2
    assert float(jnp.max(jnp.abs(x_list[1] - x_list_s[1]))) < 5e-2
    print("KERNEL_OK")
</pallas_src>

<mosaic_0001>
module attributes {stable_mosaic.version = 11 : i64} {
  func.func @_cwgcn_fused_kernel(%arg0: i32, %arg1: memref<1x128x128xbf16, #tpu.memory_space<any>>, %arg2: memref<128x128xbf16, #tpu.memory_space<vmem>>, %arg3: memref<1x128xf32, #tpu.memory_space<vmem>>, %arg4: memref<128x128xbf16, #tpu.memory_space<vmem>>, %arg5: memref<1x128xf32, #tpu.memory_space<vmem>>, %arg6: memref<128x128xbf16, #tpu.memory_space<vmem>>, %arg7: memref<1x128xf32, #tpu.memory_space<vmem>>, %arg8: memref<128x128xf32, #tpu.memory_space<vmem>>, %arg9: memref<128x128xf32, #tpu.memory_space<vmem>>, %arg10: memref<128x128xf32, #tpu.memory_space<vmem>>, %arg11: memref<1x128x128xbf16, #tpu.memory_space<vmem>>, %arg12: memref<128x128xbf16, #tpu.memory_space<vmem>>, %arg13: memref<128x128xbf16, #tpu.memory_space<vmem>>, %arg14: memref<2x!tpu.dma_semaphore, #tpu.memory_space<semaphore_mem>>) attributes {dimension_semantics = [#tpu.dimension_semantics<arbitrary>], iteration_bounds = array<i64: 1>, scalar_prefetch = 0 : i64, scratch_operands = 4 : i64, tpu.core_type = #tpu.core_type<tc>, window_params = [{}, {pipeline_mode = #tpu.pipeline_mode<synchronous>, transform_indices = @transform_1, window_bounds = array<i64: 128, 128>}, {pipeline_mode = #tpu.pipeline_mode<synchronous>, transform_indices = @transform_2, window_bounds = array<i64: 1, 128>}, {pipeline_mode = #tpu.pipeline_mode<synchronous>, transform_indices = @transform_3, window_bounds = array<i64: 128, 128>}, {pipeline_mode = #tpu.pipeline_mode<synchronous>, transform_indices = @transform_4, window_bounds = array<i64: 1, 128>}, {pipeline_mode = #tpu.pipeline_mode<synchronous>, transform_indices = @transform_5, window_bounds = array<i64: 128, 128>}, {pipeline_mode = #tpu.pipeline_mode<synchronous>, transform_indices = @transform_6, window_bounds = array<i64: 1, 128>}, {transform_indices = @transform_7, window_bounds = array<i64: 128, 128>}, {pipeline_mode = #tpu.pipeline_mode<synchronous>, transform_indices = @transform_8, window_bounds = array<i64: 128, 128>}, {pipeline_mode = #tpu.pipeline_mode<synchronous>, transform_indices = @transform_9, window_bounds = array<i64: 128, 128>}]} {
    %c0_i32 = arith.constant 0 : i32
    %0 = arith.cmpi eq, %arg0, %c0_i32 : i32
    %1 = arith.extui %0 : i1 to i32
    %c0_i32_0 = arith.constant 0 : i32
    %2 = arith.cmpi ne, %1, %c0_i32_0 : i32
    scf.if %2 {
      %c0_i32_26 = arith.constant 0 : i32
      %c0_i32_27 = arith.constant 0 : i32
      %c0_i32_28 = arith.constant 0 : i32
      %c0_i32_29 = arith.constant 0 : i32
      %c0_i32_30 = arith.constant 0 : i32
      %45 = tpu.memref_slice %arg1[%c0_i32_26, %c0_i32_29, %c0_i32_30] : memref<1x128x128xbf16, #tpu.memory_space<any>> -> memref<1x128x128xbf16, #tpu.memory_space<any>>
      %46 = tpu.memref_squeeze %45 : memref<1x128x128xbf16, #tpu.memory_space<any>> -> memref<128x128xbf16, #tpu.memory_space<any>>
      %c0_i32_31 = arith.constant 0 : i32
      %c0_i32_32 = arith.constant 0 : i32
      %47 = tpu.memref_slice %arg11[%c0_i32_27, %c0_i32_31, %c0_i32_32] : memref<1x128x128xbf16, #tpu.memory_space<vmem>> -> memref<1x128x128xbf16, #tpu.memory_space<vmem>>
      %48 = tpu.memref_squeeze %47 : memref<1x128x128xbf16, #tpu.memory_space<vmem>> -> memref<128x128xbf16, #tpu.memory_space<vmem>>
      %49 = tpu.memref_slice %arg14[%c0_i32_28] : memref<2x!tpu.dma_semaphore, #tpu.memory_space<semaphore_mem>> -> memref<1x!tpu.dma_semaphore, #tpu.memory_space<semaphore_mem>>
      %50 = tpu.memref_squeeze %49 : memref<1x!tpu.dma_semaphore, #tpu.memory_space<semaphore_mem>> -> memref<!tpu.dma_semaphore, #tpu.memory_space<semaphore_mem>>
      tpu.enqueue_dma source(%46 : memref<128x128xbf16, #tpu.memory_space<any>>) target(%48 : memref<128x128xbf16, #tpu.memory_space<vmem>>) target_semaphore(%50 : memref<!tpu.dma_semaphore, #tpu.memory_space<semaphore_mem>>)
    } else {
    }
    %c1_i32 = arith.constant 1 : i32
    %3 = arith.addi %arg0, %c1_i32 : i32
    %c1_i32_1 = arith.constant 1 : i32
    %4 = arith.cmpi slt, %3, %c1_i32_1 : i32
    %5 = arith.extui %4 : i1 to i32
    %c0_i32_2 = arith.constant 0 : i32
    %6 = arith.cmpi ne, %5, %c0_i32_2 : i32
    scf.if %6 {
      %c1_i32_26 = arith.constant 1 : i32
      %45 = arith.addi %arg0, %c1_i32_26 : i32
      %c1_i32_27 = arith.constant 1 : i32
      %46 = arith.addi %arg0, %c1_i32_27 : i32
      %c2_i32_28 = arith.constant 2 : i32
      %c0_i32_29 = arith.constant 0 : i32
      %47 = arith.cmpi eq, %c2_i32_28, %c0_i32_29 : i32
      %c1_i32_30 = arith.constant 1 : i32
      %48 = arith.select %47, %c1_i32_30, %c2_i32_28 : i32
      %49 = arith.remsi %46, %48 : i32
      %c0_i32_31 = arith.constant 0 : i32
      %50 = arith.cmpi ne, %49, %c0_i32_31 : i32
      %c0_i32_32 = arith.constant 0 : i32
      %51 = arith.cmpi slt, %49, %c0_i32_32 : i32
      %c0_i32_33 = arith.constant 0 : i32
      %52 = arith.cmpi slt, %48, %c0_i32_33 : i32
      %53 = arith.xori %51, %52 : i1
      %54 = arith.andi %53, %50 : i1
      %55 = arith.addi %49, %48 : i32
      %56 = arith.select %54, %55, %49 : i32
      %c0_i32_34 = arith.constant 0 : i32
      %c0_i32_35 = arith.constant 0 : i32
      %57 = tpu.memref_slice %arg1[%45, %c0_i32_34, %c0_i32_35] : memref<1x128x128xbf16, #tpu.memory_space<any>> -> memref<1x128x128xbf16, #tpu.memory_space<any>>
      %58 = tpu.memref_squeeze %57 : memref<1x128x128xbf16, #tpu.memory_space<any>> -> memref<128x128xbf16, #tpu.memory_space<any>>
      %c0_i32_36 = arith.constant 0 : i32
      %c0_i32_37 = arith.constant 0 : i32
      %59 = tpu.memref_slice %arg11[%45, %c0_i32_36, %c0_i32_37] : memref<1x128x128xbf16, #tpu.memory_space<vmem>> -> memref<1x128x128xbf16, #tpu.memory_space<vmem>>
      %60 = tpu.memref_squeeze %59 : memref<1x128x128xbf16, #tpu.memory_space<vmem>> -> memref<128x128xbf16, #tpu.memory_space<vmem>>
      %61 = tpu.memref_slice %arg14[%56] : memref<2x!tpu.dma_semaphore, #tpu.memory_space<semaphore_mem>> -> memref<1x!tpu.dma_semaphore, #tpu.memory_space<semaphore_mem>>
      %62 = tpu.memref_squeeze %61 : memref<1x!tpu.dma_semaphore, #tpu.memory_space<semaphore_mem>> -> memref<!tpu.dma_semaphore, #tpu.memory_space<semaphore_mem>>
      tpu.enqueue_dma source(%58 : memref<128x128xbf16, #tpu.memory_space<any>>) target(%60 : memref<128x128xbf16, #tpu.memory_space<vmem>>) target_semaphore(%62 : memref<!tpu.dma_semaphore, #tpu.memory_space<semaphore_mem>>)
    } else {
    }
    %c2_i32 = arith.constant 2 : i32
    %c0_i32_3 = arith.constant 0 : i32
    %7 = arith.cmpi eq, %c2_i32, %c0_i32_3 : i32
    %c1_i32_4 = arith.constant 1 : i32
    %8 = arith.select %7, %c1_i32_4, %c2_i32 : i32
    %9 = arith.remsi %arg0, %8 : i32
    %c0_i32_5 = arith.constant 0 : i32
    %10 = arith.cmpi ne, %9, %c0_i32_5 : i32
    %c0_i32_6 = arith.constant 0 : i32
    %11 = arith.cmpi slt, %9, %c0_i32_6 : i32
    %c0_i32_7 = arith.constant 0 : i32
    %12 = arith.cmpi slt, %8, %c0_i32_7 : i32
    %13 = arith.xori %11, %12 : i1
    %14 = arith.andi %13, %10 : i1
    %15 = arith.addi %9, %8 : i32
    %16 = arith.select %14, %15, %9 : i32
    %c0_i32_8 = arith.constant 0 : i32
    %c0_i32_9 = arith.constant 0 : i32
    %17 = tpu.memref_slice %arg1[%arg0, %c0_i32_8, %c0_i32_9] : memref<1x128x128xbf16, #tpu.memory_space<any>> -> memref<1x128x128xbf16, #tpu.memory_space<any>>
    %18 = tpu.memref_squeeze %17 : memref<1x128x128xbf16, #tpu.memory_space<any>> -> memref<128x128xbf16, #tpu.memory_space<any>>
    %c0_i32_10 = arith.constant 0 : i32
    %c0_i32_11 = arith.constant 0 : i32
    %19 = tpu.memref_slice %arg11[%arg0, %c0_i32_10, %c0_i32_11] : memref<1x128x128xbf16, #tpu.memory_space<vmem>> -> memref<1x128x128xbf16, #tpu.memory_space<vmem>>
    %20 = tpu.memref_squeeze %19 : memref<1x128x128xbf16, #tpu.memory_space<vmem>> -> memref<128x128xbf16, #tpu.memory_space<vmem>>
    %21 = tpu.memref_slice %arg14[%16] : memref<2x!tpu.dma_semaphore, #tpu.memory_space<semaphore_mem>> -> memref<1x!tpu.dma_semaphore, #tpu.memory_space<semaphore_mem>>
    %22 = tpu.memref_squeeze %21 : memref<1x!tpu.dma_semaphore, #tpu.memory_space<semaphore_mem>> -> memref<!tpu.dma_semaphore, #tpu.memory_space<semaphore_mem>>
    tpu.wait_dma2 semaphore(%22 : memref<!tpu.dma_semaphore, #tpu.memory_space<semaphore_mem>>) src(%18 : memref<128x128xbf16, #tpu.memory_space<any>>) dst(%20 : memref<128x128xbf16, #tpu.memory_space<vmem>>)
    %c128_i32 = arith.constant 128 : i32
    %23 = arith.muli %arg0, %c128_i32 : i32
    %24 = tpu.assume_multiple %23, 128 : i32
    %25 = arith.index_cast %arg0 : i32 to index
    %c0 = arith.constant 0 : index
    %c0_12 = arith.constant 0 : index
    %26 = vector.load %arg11[%25, %c0, %c0_12] : memref<1x128x128xbf16, #tpu.memory_space<vmem>>, vector<1x128x128xbf16>
    %27 = vector.shape_cast %26 : vector<1x128x128xbf16> to vector<128x128xbf16>
    %c0_13 = arith.constant 0 : index
    %c0_14 = arith.constant 0 : index
    %28 = vector.load %arg2[%c0_13, %c0_14] : memref<128x128xbf16, #tpu.memory_space<vmem>>, vector<128x128xbf16>
    %cst = arith.constant dense<0.000000e+00> : vector<128x128xf32>
    %29 = tpu.matmul %27, %28, %cst {dimension_numbers = #tpu.dot_dimension_numbers<[1], [0], [0], [1], [0, 0, 1, 1], [], []>} : vector<128x128xbf16>, vector<128x128xbf16>, vector<128x128xf32> -> vector<128x128xf32>
    %c0_15 = arith.constant 0 : index
    %c0_16 = arith.constant 0 : index
    %30 = vector.load %arg3[%c0_15, %c0_16] : memref<1x128xf32, #tpu.memory_space<vmem>>, vector<1x128xf32>
    %31 = vector.broadcast %30 : vector<1x128xf32> to vector<128x128xf32>
    %32 = arith.addf %29, %31 : vector<128x128xf32>
    %cst_17 = arith.constant 0.000000e+00 : f32
    %33 = vector.broadcast %cst_17 : f32 to vector<128x128xf32>
    %34 = arith.maximumf %32, %33 : vector<128x128xf32>
    %c0_18 = arith.constant 0 : index
    %c0_19 = arith.constant 0 : index
    %35 = vector.load %arg8[%c0_18, %c0_19] : memref<128x128xf32, #tpu.memory_space<vmem>>, vector<128x128xf32>
    tpu.vector_store %arg8[%c0_18, %c0_19], %34 {strides = array<i32>} : memref<128x128xf32, #tpu.memory_space<vmem>>, vector<128x128xf32>,
    %36 = arith.truncf %34 : vector<128x128xf32> to vector<128x128xbf16>
    %c0_20 = arith.constant 0 : index
    %c0_21 = arith.constant 0 : index
    %37 = vector.load %arg4[%c0_20, %c0_21] : memref<128x128xbf16, #tpu.memory_space<vmem>>, vector<128x128xbf16>
    %cst_22 = arith.constant dense<0.000000e+00> : vector<128x128xf32>
    %38 = tpu.matmul %36, %37, %cst_22 {dimension_numbers = #tpu.dot_dimension_numbers<[1], [0], [0], [1], [0, 0, 1, 1], [], []>} : vector<128x128xbf16>, vector<128x128xbf16>, vector<128x128xf32> -> vector<128x128xf32>
    %39 = arith.truncf %38 : vector<128x128xf32> to vector<128x128xbf16>
    %40 = arith.index_cast %24 : i32 to index
    %c0_23 = arith.constant 0 : index
    %41 = vector.load %arg12[%40, %c0_23] : memref<128x128xbf16, #tpu.memory_space<vmem>>, vector<128x128xbf16>
    tpu.vector_store %arg12[%40, %c0_23], %39 {strides = array<i32>} : memref<128x128xbf16, #tpu.memory_space<vmem>>, vector<128x128xbf16>,
    %c0_i32_24 = arith.constant 0 : i32
    %42 = arith.cmpi eq, %arg0, %c0_i32_24 : i32
    %43 = arith.extui %42 : i1 to i32
    %c0_i32_25 = arith.constant 0 : i32
    %44 = arith.cmpi ne, %43, %c0_i32_25 : i32
    scf.if %44 {
      %c0_i32_26 = arith.constant 0 : i32
      %c1_i32_27 = arith.constant 1 : i32
      %45 = arith.muli %c0_i32_26, %c1_i32_27 : i32
      %c0_i32_28 = arith.constant 0 : i32
      %46 = arith.addi %c0_i32_28, %45 : i32
      %c128_i32_29 = arith.constant 128 : i32
      %47 = arith.muli %46, %c128_i32_29 : i32
      %48 = tpu.assume_multiple %47, 128 : i32
      %49 = arith.index_cast %46 : i32 to index
      %c0_30 = arith.constant 0 : index
      %c0_31 = arith.constant 0 : index
      %50 = vector.load %arg11[%49, %c0_30, %c0_31] : memref<1x128x128xbf16, #tpu.memory_space<vmem>>, vector<1x128x128xbf16>
      %51 = vector.shape_cast %50 : vector<1x128x128xbf16> to vector<128x128xbf16>
      %c0_32 = arith.constant 0 : index
      %c0_33 = arith.constant 0 : index
      %52 = vector.load %arg12[%c0_32, %c0_33] : memref<128x128xbf16, #tpu.memory_space<vmem>>, vector<128x128xbf16>
      %cst_34 = arith.constant dense<0.000000e+00> : vector<128x128xf32>
      %53 = tpu.matmul %51, %52, %cst_34 {dimension_numbers = #tpu.dot_dimension_numbers<[1], [0], [0], [1], [0, 0, 1, 1], [], []>} : vector<128x128xbf16>, vector<128x128xbf16>, vector<128x128xf32> -> vector<128x128xf32>
      %c0_35 = arith.constant 0 : index
      %c0_36 = arith.constant 0 : index
      %54 = vector.load %arg5[%c0_35, %c0_36] : memref<1x128xf32, #tpu.memory_space<vmem>>, vector<1x128xf32>
      %55 = vector.broadcast %54 : vector<1x128xf32> to vector<128x128xf32>
      %56 = arith.addf %53, %55 : vector<128x128xf32>
      %57 = arith.index_cast %48 : i32 to index
      %c0_37 = arith.constant 0 : index
      %58 = vector.load %arg9[%57, %c0_37] : memref<128x128xf32, #tpu.memory_space<vmem>>, vector<128x128xf32>
      tpu.vector_store %arg9[%57, %c0_37], %56 {strides = array<i32>} : memref<128x128xf32, #tpu.memory_space<vmem>>, vector<128x128xf32>,
      %59 = arith.truncf %56 : vector<128x128xf32> to vector<128x128xbf16>
      %c0_38 = arith.constant 0 : index
      %c0_39 = arith.constant 0 : index
      %60 = vector.load %arg6[%c0_38, %c0_39] : memref<128x128xbf16, #tpu.memory_space<vmem>>, vector<128x128xbf16>
      %cst_40 = arith.constant dense<0.000000e+00> : vector<128x128xf32>
      %61 = tpu.matmul %59, %60, %cst_40 {dimension_numbers = #tpu.dot_dimension_numbers<[1], [0], [0], [1], [0, 0, 1, 1], [], []>} : vector<128x128xbf16>, vector<128x128xbf16>, vector<128x128xf32> -> vector<128x128xf32>
      %62 = arith.truncf %61 : vector<128x128xf32> to vector<128x128xbf16>
      %63 = arith.index_cast %48 : i32 to index
      %c0_41 = arith.constant 0 : index
      %64 = vector.load %arg13[%63, %c0_41] : memref<128x128xbf16, #tpu.memory_space<vmem>>, vector<128x128xbf16>
      tpu.vector_store %arg13[%63, %c0_41], %62 {strides = array<i32>} : memref<128x128xbf16, #tpu.memory_space<vmem>>, vector<128x128xbf16>,
      %c1_i32_42 = arith.constant 1 : i32
      %c0_i32_43 = arith.constant 0 : i32
      %c1_i32_44 = arith.constant 1 : i32
      %65 = arith.muli %c0_i32_43, %c1_i32_44 : i32
      %c0_i32_45 = arith.constant 0 : i32
      %66 = arith.addi %c0_i32_45, %65 : i32
      %c128_i32_46 = arith.constant 128 : i32
      %67 = arith.muli %66, %c128_i32_46 : i32
      %68 = tpu.assume_multiple %67, 128 : i32
      %69 = arith.index_cast %66 : i32 to index
      %c0_47 = arith.constant 0 : index
      %c0_48 = arith.constant 0 : index
      %70 = vector.load %arg11[%69, %c0_47, %c0_48] : memref<1x128x128xbf16, #tpu.memory_space<vmem>>, vector<1x128x128xbf16>
      %71 = vector.shape_cast %70 : vector<1x128x128xbf16> to vector<128x128xbf16>
      %c0_49 = arith.constant 0 : index
      %c0_50 = arith.constant 0 : index
      %72 = vector.load %arg13[%c0_49, %c0_50] : memref<128x128xbf16, #tpu.memory_space<vmem>>, vector<128x128xbf16>
      %cst_51 = arith.constant dense<0.000000e+00> : vector<128x128xf32>
      %73 = tpu.matmul %71, %72, %cst_51 {dimension_numbers = #tpu.dot_dimension_numbers<[1], [0], [0], [1], [0, 0, 1, 1], [], []>} : vector<128x128xbf16>, vector<128x128xbf16>, vector<128x128xf32> -> vector<128x128xf32>
      %c0_52 = arith.constant 0 : index
      %c0_53 = arith.constant 0 : index
      %74 = vector.load %arg7[%c0_52, %c0_53] : memref<1x128xf32, #tpu.memory_space<vmem>>, vector<1x128xf32>
      %75 = vector.broadcast %74 : vector<1x128xf32> to vector<128x128xf32>
      %76 = arith.addf %73, %75 : vector<128x128xf32>
      %77 = arith.index_cast %68 : i32 to index
      %c0_54 = arith.constant 0 : index
      %78 = vector.load %arg10[%77, %c0_54] : memref<128x128xf32, #tpu.memory_space<vmem>>, vector<128x128xf32>
      tpu.vector_store %arg10[%77, %c0_54], %76 {strides = array<i32>} : memref<128x128xf32, #tpu.memory_space<vmem>>, vector<128x128xf32>,
      %c1_i32_55 = arith.constant 1 : i32
    } else {
    }
    return
  }
  func.func @transform_1(%arg0: i32) -> (i32, i32) {
    %c0_i32 = arith.constant 0 : i32
    %c0_i32_0 = arith.constant 0 : i32
    %c0_i32_1 = arith.constant 0 : i32
    return %c0_i32, %c0_i32_0 : i32, i32
  }
  func.func @transform_2(%arg0: i32) -> (i32, i32) {
    %c0_i32 = arith.constant 0 : i32
    %c0_i32_0 = arith.constant 0 : i32
    %c0_i32_1 = arith.constant 0 : i32
    return %c0_i32, %c0_i32_0 : i32, i32
  }
  func.func @transform_3(%arg0: i32) -> (i32, i32) {
    %c0_i32 = arith.constant 0 : i32
    %c0_i32_0 = arith.constant 0 : i32
    %c0_i32_1 = arith.constant 0 : i32
    return %c0_i32, %c0_i32_0 : i32, i32
  }
  func.func @transform_4(%arg0: i32) -> (i32, i32) {
    %c0_i32 = arith.constant 0 : i32
    %c0_i32_0 = arith.constant 0 : i32
    %c0_i32_1 = arith.constant 0 : i32
    return %c0_i32, %c0_i32_0 : i32, i32
  }
  func.func @transform_5(%arg0: i32) -> (i32, i32) {
    %c0_i32 = arith.constant 0 : i32
    %c0_i32_0 = arith.constant 0 : i32
    %c0_i32_1 = arith.constant 0 : i32
    return %c0_i32, %c0_i32_0 : i32, i32
  }
  func.func @transform_6(%arg0: i32) -> (i32, i32) {
    %c0_i32 = arith.constant 0 : i32
    %c0_i32_0 = arith.constant 0 : i32
    %c0_i32_1 = arith.constant 0 : i32
    return %c0_i32, %c0_i32_0 : i32, i32
  }
  func.func @transform_7(%arg0: i32) -> (i32, i32) {
    %c0_i32 = arith.constant 0 : i32
    %c0_i32_0 = arith.constant 0 : i32
    return %arg0, %c0_i32 : i32, i32
  }
  func.func @transform_8(%arg0: i32) -> (i32, i32) {
    %c0_i32 = arith.constant 0 : i32
    %c0_i32_0 = arith.constant 0 : i32
    %c0_i32_1 = arith.constant 0 : i32
    return %c0_i32, %c0_i32_0 : i32, i32
  }
  func.func @transform_9(%arg0: i32) -> (i32, i32) {
    %c0_i32 = arith.constant 0 : i32
    %c0_i32_0 = arith.constant 0 : i32
    %c0_i32_1 = arith.constant 0 : i32
    return %c0_i32, %c0_i32_0 : i32, i32
  }
}

</mosaic_0001>

<llo_original>
// kernel: tpu_custom_call.1
$region0: #{tpu_custom_call.1}
  #allocation0 [shape = 'u32[]', space=smem, size = 0x4, offset = 0x4, fixed_abs, tag = 'smem constant byte address 0x4 - core index']
  #allocation1 [shape = 'u32[144,128]{1,0:T(1,128)}', space=vmem, size = 0x12000, scoped, tag = 'internal scratch']
  #allocation2 [shape = 'bf16[1,128,128]{2,1,0:T(8,128)(2,1)}', space=vmem, size = 0x8000, scoped, tag = 'scratch operand']
  #allocation3 [shape = 'bf16[128,128]{1,0:T(8,128)(2,1)}', space=vmem, size = 0x8000, scoped, tag = 'scratch operand']
  #allocation4 [shape = 'bf16[128,128]{1,0:T(8,128)(2,1)}', space=vmem, size = 0x8000, scoped, tag = 'scratch operand']
  #allocation5 [shape = 's32[2]{0}', space=sflag, size = 0x8, scoped, tag = 'scratch operand']
  #allocation16 [shape = 's32[]', space=sflag, size = 0x4, offset = 0, fixed_abs, tag = 'sflag constant byte address 0x0 - dummy sync flag']
  #allocation17 [shape = 's32[]', space=sflag, size = 0x4, offset = 0, fixed_abs, tag = 'sflag constant byte address 0x0 - dummy sync flag']
  #allocation18 [shape = 'u32[]', space=smem, size = 0x4, offset = 0x44, fixed_abs, tag = 'smem constant byte address 0x44 - assertion arg 0']
  #allocation19 [shape = 'u32[]', space=smem, size = 0x4, offset = 0x48, fixed_abs, tag = 'smem constant byte address 0x48 - assertion arg 1']
  #allocation20 [shape = 's32[]', space=sflag, size = 0x4, offset = 0, fixed_abs, tag = 'sflag constant byte address 0x0 - dummy sync flag']
  #allocation21 [shape = 's32[]', space=sflag, size = 0x4, offset = 0, fixed_abs, tag = 'sflag constant byte address 0x0 - dummy sync flag']
  %s0 = inlined_call_operand.hbm [shape: bf16[1,128,128], index: 0, kind: input, shape index: {}]
  %s1 = inlined_call_operand.hbm [shape: bf16[128,128], index: 1, kind: input, shape index: {}]
  %s2 = inlined_call_operand.vmem [shape: f32[1,128], index: 2, kind: input, shape index: {}]
  %s3 = inlined_call_operand.hbm [shape: bf16[128,128], index: 3, kind: input, shape index: {}]
  %s4 = inlined_call_operand.vmem [shape: f32[1,128], index: 4, kind: input, shape index: {}]
  %s5 = inlined_call_operand.hbm [shape: bf16[128,128], index: 5, kind: input, shape index: {}]
  %s6 = inlined_call_operand.vmem [shape: f32[1,128], index: 6, kind: input, shape index: {}]
  %s7 = inlined_call_operand.hbm [shape: f32[128,128], index: 7, kind: output, shape index: {0}]
  %s8 = inlined_call_operand.hbm [shape: f32[128,128], index: 8, kind: output, shape index: {1}]
  %s9 = inlined_call_operand.hbm [shape: f32[128,128], index: 9, kind: output, shape index: {2}]
  %10 = xla_tuple %s7, %s8, %s9
  %s11 = sld [smem:[#allocation0]]
  $region82: #{tpu_custom_call.1} parent=0
    _
  %s13 = ssub.s32 1, %s11
  %s14 = scalar_select 0, %s13, %s11
  $region1: #{tpu_custom_call.1} parent=0
    #allocation6 [shape = 'u8[32768]{0}', space=vmem, size = 0x8000, scoped, tag = 'input window, operand 1, single buffered']
    #allocation7 [shape = 's32[1]{0}', space=sflag, size = 0x4, scoped, tag = 'scoped memory for tpu_custom_call.1']
    #allocation8 [shape = 's32[1]{0}', space=sflag, size = 0x4, scoped, tag = 'scoped memory for tpu_custom_call.1']
    #allocation9 [shape = 'u8[32768]{0}', space=vmem, size = 0x8000, scoped, tag = 'input window, operand 3, single buffered']
    #allocation10 [shape = 's32[1]{0}', space=sflag, size = 0x4, scoped, tag = 'scoped memory for tpu_custom_call.1']
    #allocation11 [shape = 'u8[32768]{0}', space=vmem, size = 0x8000, scoped, tag = 'input window, operand 5, single buffered']
    #allocation12 [shape = 'u8[65536]{0}', space=vmem, size = 0x10000, scoped, tag = 'output window, operand 0, single buffered']
    #allocation13 [shape = 'u8[65536]{0}', space=vmem, size = 0x10000, scoped, tag = 'output window, operand 1, single buffered']
    #allocation14 [shape = 's32[1]{0}', space=sflag, size = 0x4, scoped, tag = 'scoped memory for tpu_custom_call.1']
    #allocation15 [shape = 'u8[65536]{0}', space=vmem, size = 0x10000, scoped, tag = 'output window, operand 2, single buffered']
    %15 = vsyncpa [#allocation7], 0
    %16 = vsyncpa [#allocation10], 0
    %17 = vsyncpa [#allocation8], 0
    %18 = vsyncpa [#allocation14], 0
    // Predicated region
    $region2: #{tpu_custom_call.1} parent=1 // pred_check
      _
    $region3: #{tpu_custom_call.1} parent=1 // pred_check_branch
      %20 = sbr.rel (0) target = $region5
    $region4: #{tpu_custom_call.1} parent=1 // pred_region
      %s22 = ssub.s32 1024, 1024
      %23 = vsyncadd [#allocation7], %s22
      %s24 = sshll.u32 [#allocation6], 4
      %s25 = int_to_ptr.vmem [resolvable:$true] %s24
      %30 = dma.hbm_to_vmem [thread:$0]  %s1, 1024, %s25, [#allocation7], 64, 64, 4
    $region5: #{tpu_custom_call.1} parent=1 // pred_fallthru
      _
    // Predicated region
    $region6: #{tpu_custom_call.1} parent=1 // pred_check
      _
    $region7: #{tpu_custom_call.1} parent=1 // pred_check_branch
      %32 = sbr.rel (0) target = $region9
    $region8: #{tpu_custom_call.1} parent=1 // pred_region
      _
    $region9: #{tpu_custom_call.1} parent=1 // pred_fallthru
      _
    // Predicated region
    $region10: #{tpu_custom_call.1} parent=1 // pred_check
      _
    $region11: #{tpu_custom_call.1} parent=1 // pred_check_branch
      %34 = sbr.rel (0) target = $region13
    $region12: #{tpu_custom_call.1} parent=1 // pred_region
      %s36 = ssub.s32 1024, 1024
      %37 = vsyncadd [#allocation10], %s36
      %s38 = sshll.u32 [#allocation9], 4
      %s39 = int_to_ptr.vmem [resolvable:$true] %s38
      %44 = dma.hbm_to_vmem [thread:$0]  %s3, 1024, %s39, [#allocation10], 64, 64, 4
    $region13: #{tpu_custom_call.1} parent=1 // pred_fallthru
      _
    // Predicated region
    $region14: #{tpu_custom_call.1} parent=1 // pred_check
      _
    $region15: #{tpu_custom_call.1} parent=1 // pred_check_branch
      %46 = sbr.rel (0) target = $region17
    $region16: #{tpu_custom_call.1} parent=1 // pred_region
      _
    $region17: #{tpu_custom_call.1} parent=1 // pred_fallthru
      _
    // Predicated region
    $region18: #{tpu_custom_call.1} parent=1 // pred_check
      _
    $region19: #{tpu_custom_call.1} parent=1 // pred_check_branch
      %48 = sbr.rel (0) target = $region21
    $region20: #{tpu_custom_call.1} parent=1 // pred_region
      %s50 = ssub.s32 1024, 1024
      %51 = vsyncadd [#allocation10], %s50
      %s52 = sshll.u32 [#allocation11], 4
      %s53 = int_to_ptr.vmem [resolvable:$true] %s52
      %58 = dma.hbm_to_vmem [thread:$0]  %s5, 1024, %s53, [#allocation10], 64, 64, 4
    $region21: #{tpu_custom_call.1} parent=1 // pred_fallthru
      _
    // Predicated region
    $region22: #{tpu_custom_call.1} parent=1 // pred_check
      _
    $region23: #{tpu_custom_call.1} parent=1 // pred_check_branch
      %60 = sbr.rel (0) target = $region25
    $region24: #{tpu_custom_call.1} parent=1 // pred_region
      _
    $region25: #{tpu_custom_call.1} parent=1 // pred_fallthru
      _
    // Predicated region
    $region26: #{tpu_custom_call.1} parent=1 // pred_check
      _
    $region27: #{tpu_custom_call.1} parent=1 // pred_check_branch
      %62 = sbr.rel (0) target = $region29
    $region28: #{tpu_custom_call.1} parent=1 // pred_region
      %63 = dma.done [#allocation7], 1024
    $region29: #{tpu_custom_call.1} parent=1 // pred_fallthru
      _
    // Predicated region
    $region30: #{tpu_custom_call.1} parent=1 // pred_check
      _
    $region31: #{tpu_custom_call.1} parent=1 // pred_check_branch
      %65 = sbr.rel (0) target = $region33
    $region32: #{tpu_custom_call.1} parent=1 // pred_region
      %66 = dma.done [#allocation10], 1024
    $region33: #{tpu_custom_call.1} parent=1 // pred_fallthru
      _
    // Predicated region
    $region34: #{tpu_custom_call.1} parent=1 // pred_check
      _
    $region35: #{tpu_custom_call.1} parent=1 // pred_check_branch
      %68 = sbr.rel (0) target = $region37
    $region36: #{tpu_custom_call.1} parent=1 // pred_region
      %69 = dma.done [#allocation10], 1024
    $region37: #{tpu_custom_call.1} parent=1 // pred_fallthru
      _
    %p71 = scmp.eq.s32.totalorder 0, 0
    // Predicated region
    $region38: #{tpu_custom_call.1} parent=1 // pred_check
      %p72 = pneg %p71
    $region39: #{tpu_custom_call.1} parent=1 // pred_check_branch
      %74 = sbr.rel (%p72) target = $region41
    $region40: #{tpu_custom_call.1} parent=1 // pred_region
      // Predicated region
      $region42: #{tpu_custom_call.1} parent=40 // pred_check
        _
      $region43: #{tpu_custom_call.1} parent=40 // pred_check_branch
        %76 = sbr.rel target = $region45
      $region44: #{tpu_custom_call.1} parent=40 // pred_region
        %77 = sst [smem:[#allocation18]] [#allocation17]
        %78 = sst [smem:[#allocation19]] [#allocation16]
      $region45: #{tpu_custom_call.1} parent=40 // pred_fallthru
        _
      %80 = shalt.err (0)
      %s82 = sshll.u32 [#allocation2], 4
      %s83 = int_to_ptr.vmem [resolvable:$true] %s82
      %85 = dma.hbm_to_vmem [thread:$0]  %s0, 1024, %s83, [#allocation5]
    $region41: #{tpu_custom_call.1} parent=1 // pred_fallthru
      _
    %s86 = sadd.s32 0, 1
    %p87 = scmp.lt.s32.totalorder %s86, 1
    // Predicated region
    $region46: #{tpu_custom_call.1} parent=1 // pred_check
      %p88 = pneg %p87
    $region47: #{tpu_custom_call.1} parent=1 // pred_check_branch
      %90 = sbr.rel (%p88) target = $region49
    $region48: #{tpu_custom_call.1} parent=1 // pred_region
      %p91 = scmp.lt.s32.totalorder %s86, 0
      %s92 = ssub.s32 0, %s86
      %s93 = scalar_select %p91, %s92, %s86
      %s94 = sand.u32 %s93, 1
      %s95 = ssub.s32 0, %s94
      %s96 = scalar_select %p91, %s95, %s94
      %p97 = scmp.ne.s32.totalorder %s96, 0
      %p98 = scmp.lt.s32.totalorder %s96, 0
      %p99 = pnand %p98, %p97
      %p100 = pneg %p99
      %s101 = sadd.s32 %s96, 2
      %s102 = scalar_select %p100, %s101, %s96
      %s103 = smul.u32 %s86, 16
      %s104 = smul.addr %s103, 64
      %s105 = scalar_lea.hbm %s0, %s104
      %s106 = smul.addr %s103, 4
      %s107 = scalar_lea.vmem [#allocation2], %s106
      %s108 = scalar_lea.sflag [#allocation5], %s102
      // Predicated region
      $region50: #{tpu_custom_call.1} parent=48 // pred_check
        _
      $region51: #{tpu_custom_call.1} parent=48 // pred_check_branch
        %110 = sbr.rel target = $region53
      $region52: #{tpu_custom_call.1} parent=48 // pred_region
        %111 = sst [smem:[#allocation18]] [#allocation21]
        %112 = sst [smem:[#allocation19]] [#allocation20]
      $region53: #{tpu_custom_call.1} parent=48 // pred_fallthru
        _
      %114 = shalt.err (0)
      %s116 = sshll.u32 %s107, 4
      %s117 = int_to_ptr.vmem [resolvable:$true] %s116
      %119 = dma.hbm_to_vmem [thread:$0]  %s105, 1024, %s117, %s108
    $region49: #{tpu_custom_call.1} parent=1 // pred_fallthru
      _
    %s120 = ssub.s32 0, 0
    %s121 = ssub.s32 0, 0
    %p122 = scmp.ne.s32.totalorder 0, 0
    %p123 = scmp.lt.s32.totalorder 0, 0
    %p124 = pnand %p123, %p122
    %p125 = pneg %p124
    %s126 = sadd.s32 0, 2
    %s127 = scalar_select %p125, %s126, 0
    %s128 = smul.u32 0, 16
    %s129 = smul.addr %s128, 4
    %s130 = scalar_lea.vmem [#allocation2], %s129
    %s131 = scalar_lea.sflag [#allocation5], %s127
    %s132 = smul.u32 4, 16
    %s133 = smul.u32 %s132, 1
    %s134 = sshll.u32 %s133, 4
    %135 = dma.done %s131, %s134
    %s136 = smul.u32 0, 128
    %v137 = vld [vmem:[%s130] sm:$0xf]
    %v138 = vld [vmem:[%s130 + $0x4] sm:$0xf]
    %v139 = vld [vmem:[%s130 + $0x8] sm:$0xf]
    %v140 = vld [vmem:[%s130 + $0xc] sm:$0xf]
    %v141 = vld [vmem:[%s130 + $0x10] sm:$0xf]
    %v142 = vld [vmem:[%s130 + $0x14] sm:$0xf]
    %v143 = vld [vmem:[%s130 + $0x18] sm:$0xf]
    %v144 = vld [vmem:[%s130 + $0x1c] sm:$0xf]
    %v145 = vld [vmem:[%s130 + $0x20] sm:$0xf]
    %v146 = vld [vmem:[%s130 + $0x24] sm:$0xf]
    %v147 = vld [vmem:[%s130 + $0x28] sm:$0xf]
    %v148 = vld [vmem:[%s130 + $0x2c] sm:$0xf]
    %v149 = vld [vmem:[%s130 + $0x30] sm:$0xf]
    %v150 = vld [vmem:[%s130 + $0x34] sm:$0xf]
    %v151 = vld [vmem:[%s130 + $0x38] sm:$0xf]
    %v152 = vld [vmem:[%s130 + $0x3c] sm:$0xf]
    %v153 = vld [vmem:[#allocation6] sm:$0xf]
    %v154 = vld [vmem:[#allocation6 + $0x4] sm:$0xf]
    %v155 = vld [vmem:[#allocation6 + $0x8] sm:$0xf]
    %v156 = vld [vmem:[#allocation6 + $0xc] sm:$0xf]
    %v157 = vld [vmem:[#allocation6 + $0x10] sm:$0xf]
    %v158 = vld [vmem:[#allocation6 + $0x14] sm:$0xf]
    %v159 = vld [vmem:[#allocation6 + $0x18] sm:$0xf]
    %v160 = vld [vmem:[#allocation6 + $0x1c] sm:$0xf]
    %v161 = vld [vmem:[#allocation6 + $0x20] sm:$0xf]
    %v162 = vld [vmem:[#allocation6 + $0x24] sm:$0xf]
    %v163 = vld [vmem:[#allocation6 + $0x28] sm:$0xf]
    %v164 = vld [vmem:[#allocation6 + $0x2c] sm:$0xf]
    %v165 = vld [vmem:[#allocation6 + $0x30] sm:$0xf]
    %v166 = vld [vmem:[#allocation6 + $0x34] sm:$0xf]
    %v167 = vld [vmem:[#allocation6 + $0x38] sm:$0xf]
    %v168 = vld [vmem:[#allocation6 + $0x3c] sm:$0xf]
    %v169 = vld [vmem:[%s2] sm:$0x1]
    %v171 = vlaneseq
    %v172 = vshrl.u32 %v171, 7
    %v173 = vsub.s32 0, %v172
    %v174 = vrot.slane %v169, %v173
    %v192 = vunpack.c.l.b16 %v137
    %v193 = vunpack.c.l.b16 %v138
    %v194 = vunpack.c.l.b16 %v139
    %v195 = vunpack.c.l.b16 %v140
    %v196 = vunpack.c.l.b16 %v141
    %v197 = vunpack.c.l.b16 %v142
    %v198 = vunpack.c.l.b16 %v143
    %v199 = vunpack.c.l.b16 %v144
    %v200 = vunpack.c.l.b16 %v145
    %v201 = vunpack.c.l.b16 %v146
    %v202 = vunpack.c.l.b16 %v147
    %v203 = vunpack.c.l.b16 %v148
    %v204 = vunpack.c.l.b16 %v149
    %v205 = vunpack.c.l.b16 %v150
    %v206 = vunpack.c.l.b16 %v151
    %v207 = vunpack.c.l.b16 %v152
    %v208 = vpack.c.b16 %v193, %v192
    %v209 = vpack.c.b16 %v195, %v194
    %v210 = vpack.c.b16 %v197, %v196
    %v211 = vpack.c.b16 %v199, %v198
    %v212 = vpack.c.b16 %v201, %v200
    %v213 = vpack.c.b16 %v203, %v202
    %v214 = vpack.c.b16 %v205, %v204
    %v215 = vpack.c.b16 %v207, %v206
    %v240 = vunpack.c.l.b16 %v153
    %v241 = vunpack.c.l.b16 %v154
    %v242 = vunpack.c.l.b16 %v155
    %v243 = vunpack.c.l.b16 %v156
    %v244 = vunpack.c.l.b16 %v157
    %v245 = vunpack.c.l.b16 %v158
    %v246 = vunpack.c.l.b16 %v159
    %v247 = vunpack.c.l.b16 %v160
    %v248 = vunpack.c.l.b16 %v161
    %v249 = vunpack.c.l.b16 %v162
    %v250 = vunpack.c.l.b16 %v163
    %v251 = vunpack.c.l.b16 %v164
    %v252 = vunpack.c.l.b16 %v165
    %v253 = vunpack.c.l.b16 %v166
    %v254 = vunpack.c.l.b16 %v167
    %v255 = vunpack.c.l.b16 %v168
    %v256 = vpack.c.b16 %v241, %v240
    %v257 = vpack.c.b16 %v243, %v242
    %v258 = vpack.c.b16 %v245, %v244
    %v259 = vpack.c.b16 %v247, %v246
    %v260 = vpack.c.b16 %v249, %v248
    %v261 = vpack.c.b16 %v251, %v250
    %v262 = vpack.c.b16 %v253, %v252
    %v263 = vpack.c.b16 %v255, %v254
    %272 = vmatprep.subr.bf16.mxu0 0
    %273 = vmatpush1.bf16.msra.mxu0 %v263
    %274 = vmatprep.subr.bf16.mxu0 0
    %275 = vmatpush1.bf16.msra.mxu0 %v262
    %276 = vmatprep.subr.bf16.mxu0 0
    %277 = vmatpush1.bf16.msra.mxu0 %v261
    %278 = vmatprep.subr.bf16.mxu0 0
    %279 = vmatpush1.bf16.msra.mxu0 %v260
    %280 = vmatprep.subr.bf16.mxu0 0
    %281 = vmatpush1.bf16.msra.mxu0 %v259
    %282 = vmatprep.subr.bf16.mxu0 0
    %283 = vmatpush1.bf16.msra.mxu0 %v258
    %284 = vmatprep.subr.bf16.mxu0 0
    %285 = vmatpush1.bf16.msra.mxu0 %v257
    %286 = vmatprep.subr.bf16.mxu0 0
    %287 = vmatpush1.bf16.msra.mxu0 %v256
    %288 = vmatprep.subr.bf16.mxu0 0
    %289 = vmatpush2.bf16.msra.mxu0 0
    %290 = vmatprep.subr.bf16.mxu0 0
    %291 = vmatpush2.bf16.msra.mxu0 0
    %292 = vmatprep.subr.bf16.mxu0 0
    %293 = vmatpush2.bf16.msra.mxu0 0
    %294 = vmatprep.subr.bf16.mxu0 0
    %295 = vmatpush2.bf16.msra.mxu0 0
    %296 = vmatprep.subr.bf16.mxu0 0
    %297 = vmatpush2.bf16.msra.mxu0 0
    %298 = vmatprep.subr.bf16.mxu0 0
    %299 = vmatpush2.bf16.msra.mxu0 0
    %300 = vmatprep.subr.bf16.mxu0 0
    %301 = vmatpush2.bf16.msra.mxu0 0
    %302 = vmatprep.subr.bf16.mxu0 0
    %303 = vmatpush2.bf16.msra.mxu0 0
    %304 = vmatprep.mubr.bf16.mxu0 0
    %305 = vmatmul.mubr.bf16.gmra.mxu0 %v208
    %v306 = vpop.f32.mrf.mxu0
    %v307 = vadd.f32 %v174, %v306
    %v308 = vpop.f32.mrf.mxu0
    %v309 = vpop.f32.mrf.mxu0
    %v310 = vadd.f32 %v174, %v309
    %v311 = vpop.f32.mrf.mxu0
    %312 = vmatprep.mubr.bf16.mxu0 0
    %313 = vmatmul.mubr.bf16.gmra.mxu0 %v209
    %v314 = vpop.f32.mrf.mxu0
    %v315 = vadd.f32 %v174, %v314
    %v316 = vpop.f32.mrf.mxu0
    %v317 = vpop.f32.mrf.mxu0
    %v318 = vadd.f32 %v174, %v317
    %v319 = vpop.f32.mrf.mxu0
    %320 = vmatprep.mubr.bf16.mxu0 0
    %321 = vmatmul.mubr.bf16.gmra.mxu0 %v210
    %v322 = vpop.f32.mrf.mxu0
    %v323 = vadd.f32 %v174, %v322
    %v324 = vpop.f32.mrf.mxu0
    %v325 = vpop.f32.mrf.mxu0
    %v326 = vadd.f32 %v174, %v325
    %v327 = vpop.f32.mrf.mxu0
    %328 = vmatprep.mubr.bf16.mxu0 0
    %329 = vmatmul.mubr.bf16.gmra.mxu0 %v211
    %v330 = vpop.f32.mrf.mxu0
    %v331 = vadd.f32 %v174, %v330
    %v332 = vpop.f32.mrf.mxu0
    %v333 = vpop.f32.mrf.mxu0
    %v334 = vadd.f32 %v174, %v333
    %v335 = vpop.f32.mrf.mxu0
    %336 = vmatprep.mubr.bf16.mxu0 0
    %337 = vmatmul.mubr.bf16.gmra.mxu0 %v212
    %v338 = vpop.f32.mrf.mxu0
    %v339 = vadd.f32 %v174, %v338
    %v340 = vpop.f32.mrf.mxu0
    %v341 = vpop.f32.mrf.mxu0
    %v342 = vadd.f32 %v174, %v341
    %v343 = vpop.f32.mrf.mxu0
    %344 = vmatprep.mubr.bf16.mxu0 0
    %345 = vmatmul.mubr.bf16.gmra.mxu0 %v213
    %v346 = vpop.f32.mrf.mxu0
    %v347 = vadd.f32 %v174, %v346
    %v348 = vpop.f32.mrf.mxu0
    %v349 = vpop.f32.mrf.mxu0
    %v350 = vadd.f32 %v174, %v349
    %v351 = vpop.f32.mrf.mxu0
    %352 = vmatprep.mubr.bf16.mxu0 0
    %353 = vmatmul.mubr.bf16.gmra.mxu0 %v214
    %v354 = vpop.f32.mrf.mxu0
    %v355 = vadd.f32 %v174, %v354
    %v356 = vpop.f32.mrf.mxu0
    %v357 = vpop.f32.mrf.mxu0
    %v358 = vadd.f32 %v174, %v357
    %v359 = vpop.f32.mrf.mxu0
    %360 = vmatprep.mubr.bf16.mxu0 0
    %361 = vmatmul.mubr.bf16.gmra.mxu0 %v215
    %v362 = vpop.f32.mrf.mxu0
    %v363 = vadd.f32 %v174, %v362
    %v364 = vpop.f32.mrf.mxu0
    %v365 = vpop.f32.mrf.mxu0
    %v366 = vadd.f32 %v174, %v365
    %v367 = vpop.f32.mrf.mxu0
    %368 = vdwg.mxu0
    %v369 = vmax.f32 %v307, 0.0
    %v370 = vmax.f32 %v310, 0.0
    %v371 = vmax.f32 %v315, 0.0
    %v372 = vmax.f32 %v318, 0.0
    %v373 = vmax.f32 %v323, 0.0
    %v374 = vmax.f32 %v326, 0.0
    %v375 = vmax.f32 %v331, 0.0
    %v376 = vmax.f32 %v334, 0.0
    %v377 = vmax.f32 %v339, 0.0
    %v378 = vmax.f32 %v342, 0.0
    %v379 = vmax.f32 %v347, 0.0
    %v380 = vmax.f32 %v350, 0.0
    %v381 = vmax.f32 %v355, 0.0
    %v382 = vmax.f32 %v358, 0.0
    %v383 = vmax.f32 %v363, 0.0
    %v384 = vmax.f32 %v366, 0.0
    %385 = vst [vmem:[#allocation12] sm:$0xff] %v369
    %386 = vst [vmem:[#allocation12 + $0x8] sm:$0xff] %v370
    %387 = vst [vmem:[#allocation12 + $0x10] sm:$0xff] %v371
    %388 = vst [vmem:[#allocation12 + $0x18] sm:$0xff] %v372
    %389 = vst [vmem:[#allocation12 + $0x20] sm:$0xff] %v373
    %390 = vst [vmem:[#allocation12 + $0x28] sm:$0xff] %v374
    %391 = vst [vmem:[#allocation12 + $0x30] sm:$0xff] %v375
    %392 = vst [vmem:[#allocation12 + $0x38] sm:$0xff] %v376
    %393 = vst [vmem:[#allocation12 + $0x40] sm:$0xff] %v377
    %394 = vst [vmem:[#allocation12 + $0x48] sm:$0xff] %v378
    %395 = vst [vmem:[#allocation12 + $0x50] sm:$0xff] %v379
    %396 = vst [vmem:[#allocation12 + $0x58] sm:$0xff] %v380
    %397 = vst [vmem:[#allocation12 + $0x60] sm:$0xff] %v381
    %398 = vst [vmem:[#allocation12 + $0x68] sm:$0xff] %v382
    %399 = vst [vmem:[#allocation12 + $0x70] sm:$0xff] %v383
    %400 = vst [vmem:[#allocation12 + $0x78] sm:$0xff] %v384
    %v401 = vpack.c.bf16 %v370, %v369
    %v402 = vpack.c.bf16 %v372, %v371
    %v403 = vpack.c.bf16 %v374, %v373
    %v404 = vpack.c.bf16 %v376, %v375
    %v405 = vpack.c.bf16 %v378, %v377
    %v406 = vpack.c.bf16 %v380, %v379
    %v407 = vpack.c.bf16 %v382, %v381
    %v408 = vpack.c.bf16 %v384, %v383
    %v409 = vld [vmem:[#allocation9] sm:$0xf]
    %v410 = vld [vmem:[#allocation9 + $0x4] sm:$0xf]
    %v411 = vld [vmem:[#allocation9 + $0x8] sm:$0xf]
    %v412 = vld [vmem:[#allocation9 + $0xc] sm:$0xf]
    %v413 = vld [vmem:[#allocation9 + $0x10] sm:$0xf]
    %v414 = vld [vmem:[#allocation9 + $0x14] sm:$0xf]
    %v415 = vld [vmem:[#allocation9 + $0x18] sm:$0xf]
    %v416 = vld [vmem:[#allocation9 + $0x1c] sm:$0xf]
    %v417 = vld [vmem:[#allocation9 + $0x20] sm:$0xf]
    %v418 = vld [vmem:[#allocation9 + $0x24] sm:$0xf]
    %v419 = vld [vmem:[#allocation9 + $0x28] sm:$0xf]
    %v420 = vld [vmem:[#allocation9 + $0x2c] sm:$0xf]
    %v421 = vld [vmem:[#allocation9 + $0x30] sm:$0xf]
    %v422 = vld [vmem:[#allocation9 + $0x34] sm:$0xf]
    %v423 = vld [vmem:[#allocation9 + $0x38] sm:$0xf]
    %v424 = vld [vmem:[#allocation9 + $0x3c] sm:$0xf]
    %v441 = vunpack.c.l.b16 %v409
    %v442 = vunpack.c.l.b16 %v410
    %v443 = vunpack.c.l.b16 %v411
    %v444 = vunpack.c.l.b16 %v412
    %v445 = vunpack.c.l.b16 %v413
    %v446 = vunpack.c.l.b16 %v414
    %v447 = vunpack.c.l.b16 %v415
    %v448 = vunpack.c.l.b16 %v416
    %v449 = vunpack.c.l.b16 %v417
    %v450 = vunpack.c.l.b16 %v418
    %v451 = vunpack.c.l.b16 %v419
    %v452 = vunpack.c.l.b16 %v420
    %v453 = vunpack.c.l.b16 %v421
    %v454 = vunpack.c.l.b16 %v422
    %v455 = vunpack.c.l.b16 %v423
    %v456 = vunpack.c.l.b16 %v424
    %v457 = vpack.c.b16 %v442, %v441
    %v458 = vpack.c.b16 %v444, %v443
    %v459 = vpack.c.b16 %v446, %v445
    %v460 = vpack.c.b16 %v448, %v447
    %v461 = vpack.c.b16 %v450, %v449
    %v462 = vpack.c.b16 %v452, %v451
    %v463 = vpack.c.b16 %v454, %v453
    %v464 = vpack.c.b16 %v456, %v455
    %473 = vmatprep.subr.bf16.mxu0 0
    %474 = vmatpush1.bf16.msra.mxu0 %v464
    %475 = vmatprep.subr.bf16.mxu0 0
    %476 = vmatpush1.bf16.msra.mxu0 %v463
    %477 = vmatprep.subr.bf16.mxu0 0
    %478 = vmatpush1.bf16.msra.mxu0 %v462
    %479 = vmatprep.subr.bf16.mxu0 0
    %480 = vmatpush1.bf16.msra.mxu0 %v461
    %481 = vmatprep.subr.bf16.mxu0 0
    %482 = vmatpush1.bf16.msra.mxu0 %v460
    %483 = vmatprep.subr.bf16.mxu0 0
    %484 = vmatpush1.bf16.msra.mxu0 %v459
    %485 = vmatprep.subr.bf16.mxu0 0
    %486 = vmatpush1.bf16.msra.mxu0 %v458
    %487 = vmatprep.subr.bf16.mxu0 0
    %488 = vmatpush1.bf16.msra.mxu0 %v457
    %489 = vmatprep.subr.bf16.mxu0 0
    %490 = vmatpush2.bf16.msra.mxu0 0
    %491 = vmatprep.subr.bf16.mxu0 0
    %492 = vmatpush2.bf16.msra.mxu0 0
    %493 = vmatprep.subr.bf16.mxu0 0
    %494 = vmatpush2.bf16.msra.mxu0 0
    %495 = vmatprep.subr.bf16.mxu0 0
    %496 = vmatpush2.bf16.msra.mxu0 0
    %497 = vmatprep.subr.bf16.mxu0 0
    %498 = vmatpush2.bf16.msra.mxu0 0
    %499 = vmatprep.subr.bf16.mxu0 0
    %500 = vmatpush2.bf16.msra.mxu0 0
    %501 = vmatprep.subr.bf16.mxu0 0
    %502 = vmatpush2.bf16.msra.mxu0 0
    %503 = vmatprep.subr.bf16.mxu0 0
    %504 = vmatpush2.bf16.msra.mxu0 0
    %505 = vmatprep.mubr.bf16.mxu0 0
    %506 = vmatmul.mubr.bf16.gmra.mxu0 %v401
    %v507 = vpop.f32.mrf.mxu0
    %v508 = vadd.f32 0.0, %v507
    %v509 = vpop.f32.mrf.mxu0
    %v510 = vpop.f32.mrf.mxu0
    %v511 = vadd.f32 0.0, %v510
    %v512 = vpop.f32.mrf.mxu0
    %513 = vmatprep.mubr.bf16.mxu0 0
    %514 = vmatmul.mubr.bf16.gmra.mxu0 %v402
    %v515 = vpop.f32.mrf.mxu0
    %v516 = vadd.f32 0.0, %v515
    %v517 = vpop.f32.mrf.mxu0
    %v518 = vpop.f32.mrf.mxu0
    %v519 = vadd.f32 0.0, %v518
    %v520 = vpop.f32.mrf.mxu0
    %521 = vmatprep.mubr.bf16.mxu0 0
    %522 = vmatmul.mubr.bf16.gmra.mxu0 %v403
    %v523 = vpop.f32.mrf.mxu0
    %v524 = vadd.f32 0.0, %v523
    %v525 = vpop.f32.mrf.mxu0
    %v526 = vpop.f32.mrf.mxu0
    %v527 = vadd.f32 0.0, %v526
    %v528 = vpop.f32.mrf.mxu0
    %529 = vmatprep.mubr.bf16.mxu0 0
    %530 = vmatmul.mubr.bf16.gmra.mxu0 %v404
    %v531 = vpop.f32.mrf.mxu0
    %v532 = vadd.f32 0.0, %v531
    %v533 = vpop.f32.mrf.mxu0
    %v534 = vpop.f32.mrf.mxu0
    %v535 = vadd.f32 0.0, %v534
    %v536 = vpop.f32.mrf.mxu0
    %537 = vmatprep.mubr.bf16.mxu0 0
    %538 = vmatmul.mubr.bf16.gmra.mxu0 %v405
    %v539 = vpop.f32.mrf.mxu0
    %v540 = vadd.f32 0.0, %v539
    %v541 = vpop.f32.mrf.mxu0
    %v542 = vpop.f32.mrf.mxu0
    %v543 = vadd.f32 0.0, %v542
    %v544 = vpop.f32.mrf.mxu0
    %545 = vmatprep.mubr.bf16.mxu0 0
    %546 = vmatmul.mubr.bf16.gmra.mxu0 %v406
    %v547 = vpop.f32.mrf.mxu0
    %v548 = vadd.f32 0.0, %v547
    %v549 = vpop.f32.mrf.mxu0
    %v550 = vpop.f32.mrf.mxu0
    %v551 = vadd.f32 0.0, %v550
    %v552 = vpop.f32.mrf.mxu0
    %553 = vmatprep.mubr.bf16.mxu0 0
    %554 = vmatmul.mubr.bf16.gmra.mxu0 %v407
    %v555 = vpop.f32.mrf.mxu0
    %v556 = vadd.f32 0.0, %v555
    %v557 = vpop.f32.mrf.mxu0
    %v558 = vpop.f32.mrf.mxu0
    %v559 = vadd.f32 0.0, %v558
    %v560 = vpop.f32.mrf.mxu0
    %561 = vmatprep.mubr.bf16.mxu0 0
    %562 = vmatmul.mubr.bf16.gmra.mxu0 %v408
    %v563 = vpop.f32.mrf.mxu0
    %v564 = vadd.f32 0.0, %v563
    %v565 = vpop.f32.mrf.mxu0
    %v566 = vpop.f32.mrf.mxu0
    %v567 = vadd.f32 0.0, %v566
    %v568 = vpop.f32.mrf.mxu0
    %569 = vdwg.mxu0
    %v570 = vpack.c.bf16 %v511, %v508
    %v571 = vpack.c.bf16 %v519, %v516
    %v572 = vpack.c.bf16 %v527, %v524
    %v573 = vpack.c.bf16 %v535, %v532
    %v574 = vpack.c.bf16 %v543, %v540
    %v575 = vpack.c.bf16 %v551, %v548
    %v576 = vpack.c.bf16 %v559, %v556
    %v577 = vpack.c.bf16 %v567, %v564
    %v586 = vunpack.c.l.b16 %v570
    %v587 = vunpack.c.h.b16 %v570
    %v588 = vunpack.c.l.b16 %v571
    %v589 = vunpack.c.h.b16 %v571
    %v590 = vunpack.c.l.b16 %v572
    %v591 = vunpack.c.h.b16 %v572
    %v592 = vunpack.c.l.b16 %v573
    %v593 = vunpack.c.h.b16 %v573
    %v594 = vunpack.c.l.b16 %v574
    %v595 = vunpack.c.h.b16 %v574
    %v596 = vunpack.c.l.b16 %v575
    %v597 = vunpack.c.h.b16 %v575
    %v598 = vunpack.c.l.b16 %v576
    %v599 = vunpack.c.h.b16 %v576
    %v600 = vunpack.c.l.b16 %v577
    %v601 = vunpack.c.h.b16 %v577
    %v602 = vpack.c.b16 %v586, %v586
    %v603 = vpack.c.b16 %v587, %v587
    %v604 = vpack.c.b16 %v588, %v588
    %v605 = vpack.c.b16 %v589, %v589
    %v606 = vpack.c.b16 %v590, %v590
    %v607 = vpack.c.b16 %v591, %v591
    %v608 = vpack.c.b16 %v592, %v592
    %v609 = vpack.c.b16 %v593, %v593
    %v610 = vpack.c.b16 %v594, %v594
    %v611 = vpack.c.b16 %v595, %v595
    %v612 = vpack.c.b16 %v596, %v596
    %v613 = vpack.c.b16 %v597, %v597
    %v614 = vpack.c.b16 %v598, %v598
    %v615 = vpack.c.b16 %v599, %v599
    %v616 = vpack.c.b16 %v600, %v600
    %v617 = vpack.c.b16 %v601, %v601
    %s634 = sshra.s32 %s136, 3
    %s635 = sand.u32 %s136, 7
    %s636 = smul.addr %s634, 4
    %s637 = scalar_lea.vmem [#allocation3], %s636
    %638 = vst [vmem:[%s637] sm:$0xf] %v602
    %639 = vst [vmem:[%s637 + $0x4] sm:$0xf] %v603
    %640 = vst [vmem:[%s637 + $0x8] sm:$0xf] %v604
    %641 = vst [vmem:[%s637 + $0xc] sm:$0xf] %v605
    %642 = vst [vmem:[%s637 + $0x10] sm:$0xf] %v606
    %643 = vst [vmem:[%s637 + $0x14] sm:$0xf] %v607
    %644 = vst [vmem:[%s637 + $0x18] sm:$0xf] %v608
    %645 = vst [vmem:[%s637 + $0x1c] sm:$0xf] %v609
    %646 = vst [vmem:[%s637 + $0x20] sm:$0xf] %v610
    %647 = vst [vmem:[%s637 + $0x24] sm:$0xf] %v611
    %648 = vst [vmem:[%s637 + $0x28] sm:$0xf] %v612
    %649 = vst [vmem:[%s637 + $0x2c] sm:$0xf] %v613
    %650 = vst [vmem:[%s637 + $0x30] sm:$0xf] %v614
    %651 = vst [vmem:[%s637 + $0x34] sm:$0xf] %v615
    %652 = vst [vmem:[%s637 + $0x38] sm:$0xf] %v616
    %653 = vst [vmem:[%s637 + $0x3c] sm:$0xf] %v617
    // Predicated region
    $region54: #{tpu_custom_call.1} parent=1 // pred_check
      %p654 = pneg %p71
    $region55: #{tpu_custom_call.1} parent=1 // pred_check_branch
      %656 = sbr.rel (%p654) target = $region57
    $region56: #{tpu_custom_call.1} parent=1 // pred_region
      %v657 = vld [vmem:[#allocation2] sm:$0xf]
      %v658 = vld [vmem:[#allocation2 + $0x4] sm:$0xf]
      %v659 = vld [vmem:[#allocation2 + $0x8] sm:$0xf]
      %v660 = vld [vmem:[#allocation2 + $0xc] sm:$0xf]
      %v661 = vld [vmem:[#allocation2 + $0x10] sm:$0xf]
      %v662 = vld [vmem:[#allocation2 + $0x14] sm:$0xf]
      %v663 = vld [vmem:[#allocation2 + $0x18] sm:$0xf]
      %v664 = vld [vmem:[#allocation2 + $0x1c] sm:$0xf]
      %v665 = vld [vmem:[#allocation2 + $0x20] sm:$0xf]
      %v666 = vld [vmem:[#allocation2 + $0x24] sm:$0xf]
      %v667 = vld [vmem:[#allocation2 + $0x28] sm:$0xf]
      %v668 = vld [vmem:[#allocation2 + $0x2c] sm:$0xf]
      %v669 = vld [vmem:[#allocation2 + $0x30] sm:$0xf]
      %v670 = vld [vmem:[#allocation2 + $0x34] sm:$0xf]
      %v671 = vld [vmem:[#allocation2 + $0x38] sm:$0xf]
      %v672 = vld [vmem:[#allocation2 + $0x3c] sm:$0xf]
      %v673 = vld [vmem:[#allocation3] sm:$0xf]
      %v674 = vld [vmem:[#allocation3 + $0x4] sm:$0xf]
      %v675 = vld [vmem:[#allocation3 + $0x8] sm:$0xf]
      %v676 = vld [vmem:[#allocation3 + $0xc] sm:$0xf]
      %v677 = vld [vmem:[#allocation3 + $0x10] sm:$0xf]
      %v678 = vld [vmem:[#allocation3 + $0x14] sm:$0xf]
      %v679 = vld [vmem:[#allocation3 + $0x18] sm:$0xf]
      %v680 = vld [vmem:[#allocation3 + $0x1c] sm:$0xf]
      %v681 = vld [vmem:[#allocation3 + $0x20] sm:$0xf]
      %v682 = vld [vmem:[#allocation3 + $0x24] sm:$0xf]
      %v683 = vld [vmem:[#allocation3 + $0x28] sm:$0xf]
      %v684 = vld [vmem:[#allocation3 + $0x2c] sm:$0xf]
      %v685 = vld [vmem:[#allocation3 + $0x30] sm:$0xf]
      %v686 = vld [vmem:[#allocation3 + $0x34] sm:$0xf]
      %v687 = vld [vmem:[#allocation3 + $0x38] sm:$0xf]
      %v688 = vld [vmem:[#allocation3 + $0x3c] sm:$0xf]
      %v689 = vld [vmem:[%s4] sm:$0x1]
      %v691 = vlaneseq
      %v692 = vshrl.u32 %v691, 7
      %v693 = vsub.s32 0, %v692
      %v694 = vrot.slane %v689, %v693
      %v712 = vunpack.c.l.b16 %v657
      %v713 = vunpack.c.l.b16 %v658
      %v714 = vunpack.c.l.b16 %v659
      %v715 = vunpack.c.l.b16 %v660
      %v716 = vunpack.c.l.b16 %v661
      %v717 = vunpack.c.l.b16 %v662
      %v718 = vunpack.c.l.b16 %v663
      %v719 = vunpack.c.l.b16 %v664
      %v720 = vunpack.c.l.b16 %v665
      %v721 = vunpack.c.l.b16 %v666
      %v722 = vunpack.c.l.b16 %v667
      %v723 = vunpack.c.l.b16 %v668
      %v724 = vunpack.c.l.b16 %v669
      %v725 = vunpack.c.l.b16 %v670
      %v726 = vunpack.c.l.b16 %v671
      %v727 = vunpack.c.l.b16 %v672
      %v728 = vpack.c.b16 %v713, %v712
      %v729 = vpack.c.b16 %v715, %v714
      %v730 = vpack.c.b16 %v717, %v716
      %v731 = vpack.c.b16 %v719, %v718
      %v732 = vpack.c.b16 %v721, %v720
      %v733 = vpack.c.b16 %v723, %v722
      %v734 = vpack.c.b16 %v725, %v724
      %v735 = vpack.c.b16 %v727, %v726
      %v760 = vunpack.c.l.b16 %v673
      %v761 = vunpack.c.l.b16 %v674
      %v762 = vunpack.c.l.b16 %v675
      %v763 = vunpack.c.l.b16 %v676
      %v764 = vunpack.c.l.b16 %v677
      %v765 = vunpack.c.l.b16 %v678
      %v766 = vunpack.c.l.b16 %v679
      %v767 = vunpack.c.l.b16 %v680
      %v768 = vunpack.c.l.b16 %v681
      %v769 = vunpack.c.l.b16 %v682
      %v770 = vunpack.c.l.b16 %v683
      %v771 = vunpack.c.l.b16 %v684
      %v772 = vunpack.c.l.b16 %v685
      %v773 = vunpack.c.l.b16 %v686
      %v774 = vunpack.c.l.b16 %v687
      %v775 = vunpack.c.l.b16 %v688
      %v776 = vpack.c.b16 %v761, %v760
      %v777 = vpack.c.b16 %v763, %v762
      %v778 = vpack.c.b16 %v765, %v764
      %v779 = vpack.c.b16 %v767, %v766
      %v780 = vpack.c.b16 %v769, %v768
      %v781 = vpack.c.b16 %v771, %v770
      %v782 = vpack.c.b16 %v773, %v772
      %v783 = vpack.c.b16 %v775, %v774
      %792 = vmatprep.subr.bf16.mxu0 0
      %793 = vmatpush1.bf16.msra.mxu0 %v783
      %794 = vmatprep.subr.bf16.mxu0 0
      %795 = vmatpush1.bf16.msra.mxu0 %v782
      %796 = vmatprep.subr.bf16.mxu0 0
      %797 = vmatpush1.bf16.msra.mxu0 %v781
      %798 = vmatprep.subr.bf16.mxu0 0
      %799 = vmatpush1.bf16.msra.mxu0 %v780
      %800 = vmatprep.subr.bf16.mxu0 0
      %801 = vmatpush1.bf16.msra.mxu0 %v779
      %802 = vmatprep.subr.bf16.mxu0 0
      %803 = vmatpush1.bf16.msra.mxu0 %v778
      %804 = vmatprep.subr.bf16.mxu0 0
      %805 = vmatpush1.bf16.msra.mxu0 %v777
      %806 = vmatprep.subr.bf16.mxu0 0
      %807 = vmatpush1.bf16.msra.mxu0 %v776
      %808 = vmatprep.subr.bf16.mxu0 0
      %809 = vmatpush2.bf16.msra.mxu0 0
      %810 = vmatprep.subr.bf16.mxu0 0
      %811 = vmatpush2.bf16.msra.mxu0 0
      %812 = vmatprep.subr.bf16.mxu0 0
      %813 = vmatpush2.bf16.msra.mxu0 0
      %814 = vmatprep.subr.bf16.mxu0 0
      %815 = vmatpush2.bf16.msra.mxu0 0
      %816 = vmatprep.subr.bf16.mxu0 0
      %817 = vmatpush2.bf16.msra.mxu0 0
      %818 = vmatprep.subr.bf16.mxu0 0
      %819 = vmatpush2.bf16.msra.mxu0 0
      %820 = vmatprep.subr.bf16.mxu0 0
      %821 = vmatpush2.bf16.msra.mxu0 0
      %822 = vmatprep.subr.bf16.mxu0 0
      %823 = vmatpush2.bf16.msra.mxu0 0
      %824 = vmatprep.mubr.bf16.mxu0 0
      %825 = vmatmul.mubr.bf16.gmra.mxu0 %v728
      %v826 = vpop.f32.mrf.mxu0
      %v827 = vadd.f32 %v694, %v826
      %v828 = vpop.f32.mrf.mxu0
      %v829 = vpop.f32.mrf.mxu0
      %v830 = vadd.f32 %v694, %v829
      %v831 = vpop.f32.mrf.mxu0
      %832 = vmatprep.mubr.bf16.mxu0 0
      %833 = vmatmul.mubr.bf16.gmra.mxu0 %v729
      %v834 = vpop.f32.mrf.mxu0
      %v835 = vadd.f32 %v694, %v834
      %v836 = vpop.f32.mrf.mxu0
      %v837 = vpop.f32.mrf.mxu0
      %v838 = vadd.f32 %v694, %v837
      %v839 = vpop.f32.mrf.mxu0
      %840 = vmatprep.mubr.bf16.mxu0 0
      %841 = vmatmul.mubr.bf16.gmra.mxu0 %v730
      %v842 = vpop.f32.mrf.mxu0
      %v843 = vadd.f32 %v694, %v842
      %v844 = vpop.f32.mrf.mxu0
      %v845 = vpop.f32.mrf.mxu0
      %v846 = vadd.f32 %v694, %v845
      %v847 = vpop.f32.mrf.mxu0
      %848 = vmatprep.mubr.bf16.mxu0 0
      %849 = vmatmul.mubr.bf16.gmra.mxu0 %v731
      %v850 = vpop.f32.mrf.mxu0
      %v851 = vadd.f32 %v694, %v850
      %v852 = vpop.f32.mrf.mxu0
      %v853 = vpop.f32.mrf.mxu0
      %v854 = vadd.f32 %v694, %v853
      %v855 = vpop.f32.mrf.mxu0
      %856 = vmatprep.mubr.bf16.mxu0 0
      %857 = vmatmul.mubr.bf16.gmra.mxu0 %v732
      %v858 = vpop.f32.mrf.mxu0
      %v859 = vadd.f32 %v694, %v858
      %v860 = vpop.f32.mrf.mxu0
      %v861 = vpop.f32.mrf.mxu0
      %v862 = vadd.f32 %v694, %v861
      %v863 = vpop.f32.mrf.mxu0
      %864 = vmatprep.mubr.bf16.mxu0 0
      %865 = vmatmul.mubr.bf16.gmra.mxu0 %v733
      %v866 = vpop.f32.mrf.mxu0
      %v867 = vadd.f32 %v694, %v866
      %v868 = vpop.f32.mrf.mxu0
      %v869 = vpop.f32.mrf.mxu0
      %v870 = vadd.f32 %v694, %v869
      %v871 = vpop.f32.mrf.mxu0
      %872 = vmatprep.mubr.bf16.mxu0 0
      %873 = vmatmul.mubr.bf16.gmra.mxu0 %v734
      %v874 = vpop.f32.mrf.mxu0
      %v875 = vadd.f32 %v694, %v874
      %v876 = vpop.f32.mrf.mxu0
      %v877 = vpop.f32.mrf.mxu0
      %v878 = vadd.f32 %v694, %v877
      %v879 = vpop.f32.mrf.mxu0
      %880 = vmatprep.mubr.bf16.mxu0 0
      %881 = vmatmul.mubr.bf16.gmra.mxu0 %v735
      %v882 = vpop.f32.mrf.mxu0
      %v883 = vadd.f32 %v694, %v882
      %v884 = vpop.f32.mrf.mxu0
      %v885 = vpop.f32.mrf.mxu0
      %v886 = vadd.f32 %v694, %v885
      %v887 = vpop.f32.mrf.mxu0
      %888 = vdwg.mxu0
      %889 = vst [vmem:[#allocation13] sm:$0xff] %v827
      %890 = vst [vmem:[#allocation13 + $0x8] sm:$0xff] %v830
      %891 = vst [vmem:[#allocation13 + $0x10] sm:$0xff] %v835
      %892 = vst [vmem:[#allocation13 + $0x18] sm:$0xff] %v838
      %893 = vst [vmem:[#allocation13 + $0x20] sm:$0xff] %v843
      %894 = vst [vmem:[#allocation13 + $0x28] sm:$0xff] %v846
      %895 = vst [vmem:[#allocation13 + $0x30] sm:$0xff] %v851
      %896 = vst [vmem:[#allocation13 + $0x38] sm:$0xff] %v854
      %897 = vst [vmem:[#allocation13 + $0x40] sm:$0xff] %v859
      %898 = vst [vmem:[#allocation13 + $0x48] sm:$0xff] %v862
      %899 = vst [vmem:[#allocation13 + $0x50] sm:$0xff] %v867
      %900 = vst [vmem:[#allocation13 + $0x58] sm:$0xff] %v870
      %901 = vst [vmem:[#allocation13 + $0x60] sm:$0xff] %v875
      %902 = vst [vmem:[#allocation13 + $0x68] sm:$0xff] %v878
      %903 = vst [vmem:[#allocation13 + $0x70] sm:$0xff] %v883
      %904 = vst [vmem:[#allocation13 + $0x78] sm:$0xff] %v886
      %v905 = vpack.c.bf16 %v830, %v827
      %v906 = vpack.c.bf16 %v838, %v835
      %v907 = vpack.c.bf16 %v846, %v843
      %v908 = vpack.c.bf16 %v854, %v851
      %v909 = vpack.c.bf16 %v862, %v859
      %v910 = vpack.c.bf16 %v870, %v867
      %v911 = vpack.c.bf16 %v878, %v875
      %v912 = vpack.c.bf16 %v886, %v883
      %v913 = vld [vmem:[#allocation11] sm:$0xf]
      %v914 = vld [vmem:[#allocation11 + $0x4] sm:$0xf]
      %v915 = vld [vmem:[#allocation11 + $0x8] sm:$0xf]
      %v916 = vld [vmem:[#allocation11 + $0xc] sm:$0xf]
      %v917 = vld [vmem:[#allocation11 + $0x10] sm:$0xf]
      %v918 = vld [vmem:[#allocation11 + $0x14] sm:$0xf]
      %v919 = vld [vmem:[#allocation11 + $0x18] sm:$0xf]
      %v920 = vld [vmem:[#allocation11 + $0x1c] sm:$0xf]
      %v921 = vld [vmem:[#allocation11 + $0x20] sm:$0xf]
      %v922 = vld [vmem:[#allocation11 + $0x24] sm:$0xf]
      %v923 = vld [vmem:[#allocation11 + $0x28] sm:$0xf]
      %v924 = vld [vmem:[#allocation11 + $0x2c] sm:$0xf]
      %v925 = vld [vmem:[#allocation11 + $0x30] sm:$0xf]
      %v926 = vld [vmem:[#allocation11 + $0x34] sm:$0xf]
      %v927 = vld [vmem:[#allocation11 + $0x38] sm:$0xf]
      %v928 = vld [vmem:[#allocation11 + $0x3c] sm:$0xf]
      %v945 = vunpack.c.l.b16 %v913
      %v946 = vunpack.c.l.b16 %v914
      %v947 = vunpack.c.l.b16 %v915
      %v948 = vunpack.c.l.b16 %v916
      %v949 = vunpack.c.l.b16 %v917
      %v950 = vunpack.c.l.b16 %v918
      %v951 = vunpack.c.l.b16 %v919
      %v952 = vunpack.c.l.b16 %v920
      %v953 = vunpack.c.l.b16 %v921
      %v954 = vunpack.c.l.b16 %v922
      %v955 = vunpack.c.l.b16 %v923
      %v956 = vunpack.c.l.b16 %v924
      %v957 = vunpack.c.l.b16 %v925
      %v958 = vunpack.c.l.b16 %v926
      %v959 = vunpack.c.l.b16 %v927
      %v960 = vunpack.c.l.b16 %v928
      %v961 = vpack.c.b16 %v946, %v945
      %v962 = vpack.c.b16 %v948, %v947
      %v963 = vpack.c.b16 %v950, %v949
      %v964 = vpack.c.b16 %v952, %v951
      %v965 = vpack.c.b16 %v954, %v953
      %v966 = vpack.c.b16 %v956, %v955
      %v967 = vpack.c.b16 %v958, %v957
      %v968 = vpack.c.b16 %v960, %v959
      %977 = vmatprep.subr.bf16.mxu0 0
      %978 = vmatpush1.bf16.msra.mxu0 %v968
      %979 = vmatprep.subr.bf16.mxu0 0
      %980 = vmatpush1.bf16.msra.mxu0 %v967
      %981 = vmatprep.subr.bf16.mxu0 0
      %982 = vmatpush1.bf16.msra.mxu0 %v966
      %983 = vmatprep.subr.bf16.mxu0 0
      %984 = vmatpush1.bf16.msra.mxu0 %v965
      %985 = vmatprep.subr.bf16.mxu0 0
      %986 = vmatpush1.bf16.msra.mxu0 %v964
      %987 = vmatprep.subr.bf16.mxu0 0
      %988 = vmatpush1.bf16.msra.mxu0 %v963
      %989 = vmatprep.subr.bf16.mxu0 0
      %990 = vmatpush1.bf16.msra.mxu0 %v962
      %991 = vmatprep.subr.bf16.mxu0 0
      %992 = vmatpush1.bf16.msra.mxu0 %v961
      %993 = vmatprep.subr.bf16.mxu0 0
      %994 = vmatpush2.bf16.msra.mxu0 0
      %995 = vmatprep.subr.bf16.mxu0 0
      %996 = vmatpush2.bf16.msra.mxu0 0
      %997 = vmatprep.subr.bf16.mxu0 0
      %998 = vmatpush2.bf16.msra.mxu0 0
      %999 = vmatprep.subr.bf16.mxu0 0
      %1000 = vmatpush2.bf16.msra.mxu0 0
      %1001 = vmatprep.subr.bf16.mxu0 0
      %1002 = vmatpush2.bf16.msra.mxu0 0
      %1003 = vmatprep.subr.bf16.mxu0 0
      %1004 = vmatpush2.bf16.msra.mxu0 0
      %1005 = vmatprep.subr.bf16.mxu0 0
      %1006 = vmatpush2.bf16.msra.mxu0 0
      %1007 = vmatprep.subr.bf16.mxu0 0
      %1008 = vmatpush2.bf16.msra.mxu0 0
      %1009 = vmatprep.mubr.bf16.mxu0 0
      %1010 = vmatmul.mubr.bf16.gmra.mxu0 %v905
      %v1011 = vpop.f32.mrf.mxu0
      %v1012 = vadd.f32 0.0, %v1011
      %v1013 = vpop.f32.mrf.mxu0
      %v1014 = vpop.f32.mrf.mxu0
      %v1015 = vadd.f32 0.0, %v1014
      %v1016 = vpop.f32.mrf.mxu0
      %1017 = vmatprep.mubr.bf16.mxu0 0
      %1018 = vmatmul.mubr.bf16.gmra.mxu0 %v906
      %v1019 = vpop.f32.mrf.mxu0
      %v1020 = vadd.f32 0.0, %v1019
      %v1021 = vpop.f32.mrf.mxu0
      %v1022 = vpop.f32.mrf.mxu0
      %v1023 = vadd.f32 0.0, %v1022
      %v1024 = vpop.f32.mrf.mxu0
      %1025 = vmatprep.mubr.bf16.mxu0 0
      %1026 = vmatmul.mubr.bf16.gmra.mxu0 %v907
      %v1027 = vpop.f32.mrf.mxu0
      %v1028 = vadd.f32 0.0, %v1027
      %v1029 = vpop.f32.mrf.mxu0
      %v1030 = vpop.f32.mrf.mxu0
      %v1031 = vadd.f32 0.0, %v1030
      %v1032 = vpop.f32.mrf.mxu0
      %1033 = vmatprep.mubr.bf16.mxu0 0
      %1034 = vmatmul.mubr.bf16.gmra.mxu0 %v908
      %v1035 = vpop.f32.mrf.mxu0
      %v1036 = vadd.f32 0.0, %v1035
      %v1037 = vpop.f32.mrf.mxu0
      %v1038 = vpop.f32.mrf.mxu0
      %v1039 = vadd.f32 0.0, %v1038
      %v1040 = vpop.f32.mrf.mxu0
      %1041 = vmatprep.mubr.bf16.mxu0 0
      %1042 = vmatmul.mubr.bf16.gmra.mxu0 %v909
      %v1043 = vpop.f32.mrf.mxu0
      %v1044 = vadd.f32 0.0, %v1043
      %v1045 = vpop.f32.mrf.mxu0
      %v1046 = vpop.f32.mrf.mxu0
      %v1047 = vadd.f32 0.0, %v1046
      %v1048 = vpop.f32.mrf.mxu0
      %1049 = vmatprep.mubr.bf16.mxu0 0
      %1050 = vmatmul.mubr.bf16.gmra.mxu0 %v910
      %v1051 = vpop.f32.mrf.mxu0
      %v1052 = vadd.f32 0.0, %v1051
      %v1053 = vpop.f32.mrf.mxu0
      %v1054 = vpop.f32.mrf.mxu0
      %v1055 = vadd.f32 0.0, %v1054
      %v1056 = vpop.f32.mrf.mxu0
      %1057 = vmatprep.mubr.bf16.mxu0 0
      %1058 = vmatmul.mubr.bf16.gmra.mxu0 %v911
      %v1059 = vpop.f32.mrf.mxu0
      %v1060 = vadd.f32 0.0, %v1059
      %v1061 = vpop.f32.mrf.mxu0
      %v1062 = vpop.f32.mrf.mxu0
      %v1063 = vadd.f32 0.0, %v1062
      %v1064 = vpop.f32.mrf.mxu0
      %1065 = vmatprep.mubr.bf16.mxu0 0
      %1066 = vmatmul.mubr.bf16.gmra.mxu0 %v912
      %v1067 = vpop.f32.mrf.mxu0
      %v1068 = vadd.f32 0.0, %v1067
      %v1069 = vpop.f32.mrf.mxu0
      %v1070 = vpop.f32.mrf.mxu0
      %v1071 = vadd.f32 0.0, %v1070
      %v1072 = vpop.f32.mrf.mxu0
      %1073 = vdwg.mxu0
      %v1074 = vpack.c.bf16 %v1015, %v1012
      %v1075 = vpack.c.bf16 %v1023, %v1020
      %v1076 = vpack.c.bf16 %v1031, %v1028
      %v1077 = vpack.c.bf16 %v1039, %v1036
      %v1078 = vpack.c.bf16 %v1047, %v1044
      %v1079 = vpack.c.bf16 %v1055, %v1052
      %v1080 = vpack.c.bf16 %v1063, %v1060
      %v1081 = vpack.c.bf16 %v1071, %v1068
      %v1090 = vunpack.c.l.b16 %v1074
      %v1091 = vunpack.c.h.b16 %v1074
      %v1092 = vunpack.c.l.b16 %v1075
      %v1093 = vunpack.c.h.b16 %v1075
      %v1094 = vunpack.c.l.b16 %v1076
      %v1095 = vunpack.c.h.b16 %v1076
      %v1096 = vunpack.c.l.b16 %v1077
      %v1097 = vunpack.c.h.b16 %v1077
      %v1098 = vunpack.c.l.b16 %v1078
      %v1099 = vunpack.c.h.b16 %v1078
      %v1100 = vunpack.c.l.b16 %v1079
      %v1101 = vunpack.c.h.b16 %v1079
      %v1102 = vunpack.c.l.b16 %v1080
      %v1103 = vunpack.c.h.b16 %v1080
      %v1104 = vunpack.c.l.b16 %v1081
      %v1105 = vunpack.c.h.b16 %v1081
      %v1106 = vpack.c.b16 %v1090, %v1090
      %v1107 = vpack.c.b16 %v1091, %v1091
      %v1108 = vpack.c.b16 %v1092, %v1092
      %v1109 = vpack.c.b16 %v1093, %v1093
      %v1110 = vpack.c.b16 %v1094, %v1094
      %v1111 = vpack.c.b16 %v1095, %v1095
      %v1112 = vpack.c.b16 %v1096, %v1096
      %v1113 = vpack.c.b16 %v1097, %v1097
      %v1114 = vpack.c.b16 %v1098, %v1098
      %v1115 = vpack.c.b16 %v1099, %v1099
      %v1116 = vpack.c.b16 %v1100, %v1100
      %v1117 = vpack.c.b16 %v1101, %v1101
      %v1118 = vpack.c.b16 %v1102, %v1102
      %v1119 = vpack.c.b16 %v1103, %v1103
      %v1120 = vpack.c.b16 %v1104, %v1104
      %v1121 = vpack.c.b16 %v1105, %v1105
      %1138 = vst [vmem:[#allocation4] sm:$0xf] %v1106
      %1139 = vst [vmem:[#allocation4 + $0x4] sm:$0xf] %v1107
      %1140 = vst [vmem:[#allocation4 + $0x8] sm:$0xf] %v1108
      %1141 = vst [vmem:[#allocation4 + $0xc] sm:$0xf] %v1109
      %1142 = vst [vmem:[#allocation4 + $0x10] sm:$0xf] %v1110
      %1143 = vst [vmem:[#allocation4 + $0x14] sm:$0xf] %v1111
      %1144 = vst [vmem:[#allocation4 + $0x18] sm:$0xf] %v1112
      %1145 = vst [vmem:[#allocation4 + $0x1c] sm:$0xf] %v1113
      %1146 = vst [vmem:[#allocation4 + $0x20] sm:$0xf] %v1114
      %1147 = vst [vmem:[#allocation4 + $0x24] sm:$0xf] %v1115
      %1148 = vst [vmem:[#allocation4 + $0x28] sm:$0xf] %v1116
      %1149 = vst [vmem:[#allocation4 + $0x2c] sm:$0xf] %v1117
      %1150 = vst [vmem:[#allocation4 + $0x30] sm:$0xf] %v1118
      %1151 = vst [vmem:[#allocation4 + $0x34] sm:$0xf] %v1119
      %1152 = vst [vmem:[#allocation4 + $0x38] sm:$0xf] %v1120
      %1153 = vst [vmem:[#allocation4 + $0x3c] sm:$0xf] %v1121
      %v1154 = vld [vmem:[#allocation2] sm:$0xf]
      %v1155 = vld [vmem:[#allocation2 + $0x4] sm:$0xf]
      %v1156 = vld [vmem:[#allocation2 + $0x8] sm:$0xf]
      %v1157 = vld [vmem:[#allocation2 + $0xc] sm:$0xf]
      %v1158 = vld [vmem:[#allocation2 + $0x10] sm:$0xf]
      %v1159 = vld [vmem:[#allocation2 + $0x14] sm:$0xf]
      %v1160 = vld [vmem:[#allocation2 + $0x18] sm:$0xf]
      %v1161 = vld [vmem:[#allocation2 + $0x1c] sm:$0xf]
      %v1162 = vld [vmem:[#allocation2 + $0x20] sm:$0xf]
      %v1163 = vld [vmem:[#allocation2 + $0x24] sm:$0xf]
      %v1164 = vld [vmem:[#allocation2 + $0x28] sm:$0xf]
      %v1165 = vld [vmem:[#allocation2 + $0x2c] sm:$0xf]
      %v1166 = vld [vmem:[#allocation2 + $0x30] sm:$0xf]
      %v1167 = vld [vmem:[#allocation2 + $0x34] sm:$0xf]
      %v1168 = vld [vmem:[#allocation2 + $0x38] sm:$0xf]
      %v1169 = vld [vmem:[#allocation2 + $0x3c] sm:$0xf]
      %v1170 = vld [vmem:[#allocation4] sm:$0xf]
      %v1171 = vld [vmem:[#allocation4 + $0x4] sm:$0xf]
      %v1172 = vld [vmem:[#allocation4 + $0x8] sm:$0xf]
      %v1173 = vld [vmem:[#allocation4 + $0xc] sm:$0xf]
      %v1174 = vld [vmem:[#allocation4 + $0x10] sm:$0xf]
      %v1175 = vld [vmem:[#allocation4 + $0x14] sm:$0xf]
      %v1176 = vld [vmem:[#allocation4 + $0x18] sm:$0xf]
      %v1177 = vld [vmem:[#allocation4 + $0x1c] sm:$0xf]
      %v1178 = vld [vmem:[#allocation4 + $0x20] sm:$0xf]
      %v1179 = vld [vmem:[#allocation4 + $0x24] sm:$0xf]
      %v1180 = vld [vmem:[#allocation4 + $0x28] sm:$0xf]
      %v1181 = vld [vmem:[#allocation4 + $0x2c] sm:$0xf]
      %v1182 = vld [vmem:[#allocation4 + $0x30] sm:$0xf]
      %v1183 = vld [vmem:[#allocation4 + $0x34] sm:$0xf]
      %v1184 = vld [vmem:[#allocation4 + $0x38] sm:$0xf]
      %v1185 = vld [vmem:[#allocation4 + $0x3c] sm:$0xf]
      %v1186 = vld [vmem:[%s6] sm:$0x1]
      %v1188 = vlaneseq
      %v1189 = vshrl.u32 %v1188, 7
      %v1190 = vsub.s32 0, %v1189
      %v1191 = vrot.slane %v1186, %v1190
      %v1209 = vunpack.c.l.b16 %v1154
      %v1210 = vunpack.c.l.b16 %v1155
      %v1211 = vunpack.c.l.b16 %v1156
      %v1212 = vunpack.c.l.b16 %v1157
      %v1213 = vunpack.c.l.b16 %v1158
      %v1214 = vunpack.c.l.b16 %v1159
      %v1215 = vunpack.c.l.b16 %v1160
      %v1216 = vunpack.c.l.b16 %v1161
      %v1217 = vunpack.c.l.b16 %v1162
      %v1218 = vunpack.c.l.b16 %v1163
      %v1219 = vunpack.c.l.b16 %v1164
      %v1220 = vunpack.c.l.b16 %v1165
      %v1221 = vunpack.c.l.b16 %v1166
      %v1222 = vunpack.c.l.b16 %v1167
      %v1223 = vunpack.c.l.b16 %v1168
      %v1224 = vunpack.c.l.b16 %v1169
      %v1225 = vpack.c.b16 %v1210, %v1209
      %v1226 = vpack.c.b16 %v1212, %v1211
      %v1227 = vpack.c.b16 %v1214, %v1213
      %v1228 = vpack.c.b16 %v1216, %v1215
      %v1229 = vpack.c.b16 %v1218, %v1217
      %v1230 = vpack.c.b16 %v1220, %v1219
      %v1231 = vpack.c.b16 %v1222, %v1221
      %v1232 = vpack.c.b16 %v1224, %v1223
      %v1257 = vunpack.c.l.b16 %v1170
      %v1258 = vunpack.c.l.b16 %v1171
      %v1259 = vunpack.c.l.b16 %v1172
      %v1260 = vunpack.c.l.b16 %v1173
      %v1261 = vunpack.c.l.b16 %v1174
      %v1262 = vunpack.c.l.b16 %v1175
      %v1263 = vunpack.c.l.b16 %v1176
      %v1264 = vunpack.c.l.b16 %v1177
      %v1265 = vunpack.c.l.b16 %v1178
      %v1266 = vunpack.c.l.b16 %v1179
      %v1267 = vunpack.c.l.b16 %v1180
      %v1268 = vunpack.c.l.b16 %v1181
      %v1269 = vunpack.c.l.b16 %v1182
      %v1270 = vunpack.c.l.b16 %v1183
      %v1271 = vunpack.c.l.b16 %v1184
      %v1272 = vunpack.c.l.b16 %v1185
      %v1273 = vpack.c.b16 %v1258, %v1257
      %v1274 = vpack.c.b16 %v1260, %v1259
      %v1275 = vpack.c.b16 %v1262, %v1261
      %v1276 = vpack.c.b16 %v1264, %v1263
      %v1277 = vpack.c.b16 %v1266, %v1265
      %v1278 = vpack.c.b16 %v1268, %v1267
      %v1279 = vpack.c.b16 %v1270, %v1269
      %v1280 = vpack.c.b16 %v1272, %v1271
      %1289 = vmatprep.subr.bf16.mxu0 0
      %1290 = vmatpush1.bf16.msra.mxu0 %v1280
      %1291 = vmatprep.subr.bf16.mxu0 0
      %1292 = vmatpush1.bf16.msra.mxu0 %v1279
      %1293 = vmatprep.subr.bf16.mxu0 0
      %1294 = vmatpush1.bf16.msra.mxu0 %v1278
      %1295 = vmatprep.subr.bf16.mxu0 0
      %1296 = vmatpush1.bf16.msra.mxu0 %v1277
      %1297 = vmatprep.subr.bf16.mxu0 0
      %1298 = vmatpush1.bf16.msra.mxu0 %v1276
      %1299 = vmatprep.subr.bf16.mxu0 0
      %1300 = vmatpush1.bf16.msra.mxu0 %v1275
      %1301 = vmatprep.subr.bf16.mxu0 0
      %1302 = vmatpush1.bf16.msra.mxu0 %v1274
      %1303 = vmatprep.subr.bf16.mxu0 0
      %1304 = vmatpush1.bf16.msra.mxu0 %v1273
      %1305 = vmatprep.subr.bf16.mxu0 0
      %1306 = vmatpush2.bf16.msra.mxu0 0
      %1307 = vmatprep.subr.bf16.mxu0 0
      %1308 = vmatpush2.bf16.msra.mxu0 0
      %1309 = vmatprep.subr.bf16.mxu0 0
      %1310 = vmatpush2.bf16.msra.mxu0 0
      %1311 = vmatprep.subr.bf16.mxu0 0
      %1312 = vmatpush2.bf16.msra.mxu0 0
      %1313 = vmatprep.subr.bf16.mxu0 0
      %1314 = vmatpush2.bf16.msra.mxu0 0
      %1315 = vmatprep.subr.bf16.mxu0 0
      %1316 = vmatpush2.bf16.msra.mxu0 0
      %1317 = vmatprep.subr.bf16.mxu0 0
      %1318 = vmatpush2.bf16.msra.mxu0 0
      %1319 = vmatprep.subr.bf16.mxu0 0
      %1320 = vmatpush2.bf16.msra.mxu0 0
      %1321 = vmatprep.mubr.bf16.mxu0 0
      %1322 = vmatmul.mubr.bf16.gmra.mxu0 %v1225
      %v1323 = vpop.f32.mrf.mxu0
      %v1324 = vadd.f32 %v1191, %v1323
      %v1325 = vpop.f32.mrf.mxu0
      %v1326 = vpop.f32.mrf.mxu0
      %v1327 = vadd.f32 %v1191, %v1326
      %v1328 = vpop.f32.mrf.mxu0
      %1329 = vmatprep.mubr.bf16.mxu0 0
      %1330 = vmatmul.mubr.bf16.gmra.mxu0 %v1226
      %v1331 = vpop.f32.mrf.mxu0
      %v1332 = vadd.f32 %v1191, %v1331
      %v1333 = vpop.f32.mrf.mxu0
      %v1334 = vpop.f32.mrf.mxu0
      %v1335 = vadd.f32 %v1191, %v1334
      %v1336 = vpop.f32.mrf.mxu0
      %1337 = vmatprep.mubr.bf16.mxu0 0
      %1338 = vmatmul.mubr.bf16.gmra.mxu0 %v1227
      %v1339 = vpop.f32.mrf.mxu0
      %v1340 = vadd.f32 %v1191, %v1339
      %v1341 = vpop.f32.mrf.mxu0
      %v1342 = vpop.f32.mrf.mxu0
      %v1343 = vadd.f32 %v1191, %v1342
      %v1344 = vpop.f32.mrf.mxu0
      %1345 = vmatprep.mubr.bf16.mxu0 0
      %1346 = vmatmul.mubr.bf16.gmra.mxu0 %v1228
      %v1347 = vpop.f32.mrf.mxu0
      %v1348 = vadd.f32 %v1191, %v1347
      %v1349 = vpop.f32.mrf.mxu0
      %v1350 = vpop.f32.mrf.mxu0
      %v1351 = vadd.f32 %v1191, %v1350
      %v1352 = vpop.f32.mrf.mxu0
      %1353 = vmatprep.mubr.bf16.mxu0 0
      %1354 = vmatmul.mubr.bf16.gmra.mxu0 %v1229
      %v1355 = vpop.f32.mrf.mxu0
      %v1356 = vadd.f32 %v1191, %v1355
      %v1357 = vpop.f32.mrf.mxu0
      %v1358 = vpop.f32.mrf.mxu0
      %v1359 = vadd.f32 %v1191, %v1358
      %v1360 = vpop.f32.mrf.mxu0
      %1361 = vmatprep.mubr.bf16.mxu0 0
      %1362 = vmatmul.mubr.bf16.gmra.mxu0 %v1230
      %v1363 = vpop.f32.mrf.mxu0
      %v1364 = vadd.f32 %v1191, %v1363
      %v1365 = vpop.f32.mrf.mxu0
      %v1366 = vpop.f32.mrf.mxu0
      %v1367 = vadd.f32 %v1191, %v1366
      %v1368 = vpop.f32.mrf.mxu0
      %1369 = vmatprep.mubr.bf16.mxu0 0
      %1370 = vmatmul.mubr.bf16.gmra.mxu0 %v1231
      %v1371 = vpop.f32.mrf.mxu0
      %v1372 = vadd.f32 %v1191, %v1371
      %v1373 = vpop.f32.mrf.mxu0
      %v1374 = vpop.f32.mrf.mxu0
      %v1375 = vadd.f32 %v1191, %v1374
      %v1376 = vpop.f32.mrf.mxu0
      %1377 = vmatprep.mubr.bf16.mxu0 0
      %1378 = vmatmul.mubr.bf16.gmra.mxu0 %v1232
      %v1379 = vpop.f32.mrf.mxu0
      %v1380 = vadd.f32 %v1191, %v1379
      %v1381 = vpop.f32.mrf.mxu0
      %v1382 = vpop.f32.mrf.mxu0
      %v1383 = vadd.f32 %v1191, %v1382
      %v1384 = vpop.f32.mrf.mxu0
      %1385 = vdwg.mxu0
      %1386 = vst [vmem:[#allocation15] sm:$0xff] %v1324
      %1387 = vst [vmem:[#allocation15 + $0x8] sm:$0xff] %v1327
      %1388 = vst [vmem:[#allocation15 + $0x10] sm:$0xff] %v1332
      %1389 = vst [vmem:[#allocation15 + $0x18] sm:$0xff] %v1335
      %1390 = vst [vmem:[#allocation15 + $0x20] sm:$0xff] %v1340
      %1391 = vst [vmem:[#allocation15 + $0x28] sm:$0xff] %v1343
      %1392 = vst [vmem:[#allocation15 + $0x30] sm:$0xff] %v1348
      %1393 = vst [vmem:[#allocation15 + $0x38] sm:$0xff] %v1351
      %1394 = vst [vmem:[#allocation15 + $0x40] sm:$0xff] %v1356
      %1395 = vst [vmem:[#allocation15 + $0x48] sm:$0xff] %v1359
      %1396 = vst [vmem:[#allocation15 + $0x50] sm:$0xff] %v1364
      %1397 = vst [vmem:[#allocation15 + $0x58] sm:$0xff] %v1367
      %1398 = vst [vmem:[#allocation15 + $0x60] sm:$0xff] %v1372
      %1399 = vst [vmem:[#allocation15 + $0x68] sm:$0xff] %v1375
      %1400 = vst [vmem:[#allocation15 + $0x70] sm:$0xff] %v1380
      %1401 = vst [vmem:[#allocation15 + $0x78] sm:$0xff] %v1383
    $region57: #{tpu_custom_call.1} parent=1 // pred_fallthru
      _
    // Predicated region
    $region58: #{tpu_custom_call.1} parent=1 // pred_check
      _
    $region59: #{tpu_custom_call.1} parent=1 // pred_check_branch
      %1403 = sbr.rel (0) target = $region61
    $region60: #{tpu_custom_call.1} parent=1 // pred_region
      %s1405 = ssub.s32 2048, 2048
      %1406 = vsyncadd [#allocation8], %s1405
      %s1407 = sshll.u32 [#allocation12], 4
      %s1408 = int_to_ptr.vmem [resolvable:$true] %s1407
      %1413 = dma.vmem_to_hbm [thread:$0]  %s1408, 2048, %s7, [#allocation8], 128, 128, 8
    $region61: #{tpu_custom_call.1} parent=1 // pred_fallthru
      _
    // Predicated region
    $region62: #{tpu_custom_call.1} parent=1 // pred_check
      _
    $region63: #{tpu_custom_call.1} parent=1 // pred_check_branch
      %1415 = sbr.rel (0) target = $region65
    $region64: #{tpu_custom_call.1} parent=1 // pred_region
      %s1417 = ssub.s32 2048, 2048
      %1418 = vsyncadd [#allocation14], %s1417
      %s1419 = sshll.u32 [#allocation13], 4
      %s1420 = int_to_ptr.vmem [resolvable:$true] %s1419
      %1425 = dma.vmem_to_hbm [thread:$0]  %s1420, 2048, %s8, [#allocation14], 128, 128, 8
    $region65: #{tpu_custom_call.1} parent=1 // pred_fallthru
      _
    // Predicated region
    $region66: #{tpu_custom_call.1} parent=1 // pred_check
      _
    $region67: #{tpu_custom_call.1} parent=1 // pred_check_branch
      %1427 = sbr.rel (0) target = $region69
    $region68: #{tpu_custom_call.1} parent=1 // pred_region
      %s1429 = ssub.s32 2048, 2048
      %1430 = vsyncadd [#allocation14], %s1429
      %s1431 = sshll.u32 [#allocation15], 4
      %s1432 = int_to_ptr.vmem [resolvable:$true] %s1431
      %1437 = dma.vmem_to_hbm [thread:$0]  %s1432, 2048, %s9, [#allocation14], 128, 128, 8
    $region69: #{tpu_custom_call.1} parent=1 // pred_fallthru
      _
    // Predicated region
    $region70: #{tpu_custom_call.1} parent=1 // pred_check
      _
    $region71: #{tpu_custom_call.1} parent=1 // pred_check_branch
      %1439 = sbr.rel (0) target = $region73
    $region72: #{tpu_custom_call.1} parent=1 // pred_region
      %1440 = dma.done [#allocation8], 2048
    $region73: #{tpu_custom_call.1} parent=1 // pred_fallthru
      _
    // Predicated region
    $region74: #{tpu_custom_call.1} parent=1 // pred_check
      _
    $region75: #{tpu_custom_call.1} parent=1 // pred_check_branch
      %1442 = sbr.rel (0) target = $region77
    $region76: #{tpu_custom_call.1} parent=1 // pred_region
      %1443 = dma.done [#allocation14], 2048
    $region77: #{tpu_custom_call.1} parent=1 // pred_fallthru
      _
    // Predicated region
    $region78: #{tpu_custom_call.1} parent=1 // pred_check
      _
    $region79: #{tpu_custom_call.1} parent=1 // pred_check_branch
      %1445 = sbr.rel (0) target = $region81
    $region80: #{tpu_custom_call.1} parent=1 // pred_region
      %1446 = dma.done [#allocation14], 2048
    $region81: #{tpu_custom_call.1} parent=1 // pred_fallthru
      _
    %1447 = vsyncpa [#allocation7], 1
    %1448 = vsyncpa [#allocation10], 1
    %1449 = vsyncpa [#allocation8], 1
    %1450 = vsyncpa [#allocation14], 1
  %1451 = vsyncmov [#allocation5]
  %s1452 = vpop.sfrf %1451
  %p1453 = scmp.eq.s32.totalorder %s1452, 0
  %p1454 = pneg %p1453
  %1456 = shalt.err (%p1454)
  %s1457 = scalar_lea.sflag [#allocation5], 1
  %1458 = vsyncmov %s1457
  %s1459 = vpop.sfrf %1458
  %p1460 = scmp.eq.s32.totalorder %s1459, 0
  %p1461 = pneg %p1460
  %1463 = shalt.err (%p1461)

</llo_original>
